<compile_context>
chip_gen: v5e
topology: v5e:2x2
jax: 0.10.0
libtpu: 0.0.40
codegen_flags: <defaults>
</compile_context>

<pallas_src>
import jax
import jax.numpy as jnp
from jax.experimental import pallas as pl
from jax.experimental.pallas import tpu as pltpu


# ---------------------------------------------------------------------------
# Kernel: both per-modality Classifier MLPs for one batch tile.
# ---------------------------------------------------------------------------
def _late_fusion_kernel(xt_ref, xa_ref,
                        t_w1, t_b1, t_w2, t_b2, t_w3,
                        a_w1, a_b1, a_w2, a_b2, a_w3,
                        b3, out_ref):
    """out = 0.5 * (Classifier_text(text) + Classifier_audio(audio)).

    The 0.5 scale and summed layer-3 bias are pre-folded into t_w3/a_w3/b3.
    All matmuls run on the MXU with f32 accumulation; biases/accumulators stay
    f32, intermediates are kept in the weight compute dtype (bf16 by default).
    Dropout is identity at eval.
    """
    cd = t_w1.dtype

    def mlp2(x, w1, b1, w2, b2):
        h = jnp.dot(x, w1[...], preferred_element_type=jnp.float32)
        h = jnp.maximum(h + b1[...], 0.0).astype(cd)
        h = jnp.dot(h, w2[...], preferred_element_type=jnp.float32)
        return jnp.maximum(h + b2[...], 0.0).astype(cd)

    h_t = mlp2(xt_ref[...].astype(cd), t_w1, t_b1, t_w2, t_b2)
    h_a = mlp2(xa_ref[...].astype(cd), a_w1, a_b1, a_w2, a_b2)

    logits = jnp.dot(h_t, t_w3[...], preferred_element_type=jnp.float32)
    logits = logits + jnp.dot(h_a, a_w3[...], preferred_element_type=jnp.float32)
    out_ref[...] = (logits + b3[...]).astype(out_ref.dtype)


# ---------------------------------------------------------------------------
# Parameter packing
# ---------------------------------------------------------------------------
def pack_params(params, *, compute_dtype=jnp.bfloat16, lane_pad=128):
    """Cast weights to compute dtype, fold 0.5 + summed bias into layer 3,
    pad num_classes to a lane-dense width (zero columns sliced off later)."""
    num_classes = params["t_w3"].shape[1]
    c_pad = pl.cdiv(num_classes, lane_pad) * lane_pad
    pad_c = ((0, 0), (0, c_pad - num_classes))

    def w(name):
        return params[name].astype(compute_dtype)

    def b(name):
        return params[name].astype(jnp.float32)

    # 0.5 is a power of two -> pre-scaling before the bf16 cast is exact.
    t_w3 = jnp.pad(params["t_w3"] * 0.5, pad_c).astype(compute_dtype)
    a_w3 = jnp.pad(params["a_w3"] * 0.5, pad_c).astype(compute_dtype)
    b3 = jnp.pad((params["t_b3"] + params["a_b3"]) * 0.5, pad_c).astype(jnp.float32)

    return dict(
        t_w1=w("t_w1"), t_b1=b("t_b1"), t_w2=w("t_w2"), t_b2=b("t_b2"), t_w3=t_w3,
        a_w1=w("a_w1"), a_b1=b("a_b1"), a_w2=w("a_w2"), a_b2=b("a_b2"), a_w3=a_w3,
        b3=b3, num_classes=num_classes,
    )


def _pick_batch_tile(batch, compute_dtype):
    """Tile heuristic per perf review:
    * bf16 packs 16 rows per vreg sublane group -> 16-aligned tiles (8 for f32).
    * batch <= 256: one fat grid step (best on single-TC v5e/v6e; at tiny batch
      the duplicated weight DMA makes splitting a loss on v7x too).
    * batch  > 256: 256-row tiles; the "parallel" batch axis lets v7x shard."""
    align = 16 if jnp.dtype(compute_dtype) == jnp.dtype(jnp.bfloat16) else 8
    b_al = ((batch + align - 1) // align) * align
    if b_al <= 256:
        return b_al
    return 256


def _vmem_limit_bytes(bt, d_t, d_a, h, c_pad, compute_dtype):
    """Explicit scoped-VMEM request (v5e default is only 16 MiB)."""
    wb = jnp.dtype(compute_dtype).itemsize
    weight_bytes = ((d_t + d_a) * h + 2 * h * h + 2 * h * c_pad) * wb
    bias_bytes = (4 * h + c_pad) * 4
    io_bytes = 2 * bt * (d_t + d_a) * 4        # double-buffered f32 input tiles
    out_bytes = 2 * bt * c_pad * 4             # double-buffered f32 output tile
    act_bytes = 4 * bt * (2 * h + c_pad) * 4   # live activations / f32 accums
    total = weight_bytes + bias_bytes + io_bytes + out_bytes + act_bytes
    # 2x headroom, floor 8 MiB, cap at v7x's 64 MiB physical VMEM.
    return int(min(64 * 2**20, max(2 * total, 8 * 2**20)))


# ---------------------------------------------------------------------------
# Wrapper
# ---------------------------------------------------------------------------
def late_fusion_forward(audio_emb, text_emb, packed, *, batch_tile=None):
    """Fused LateFusionModel forward (return_features=False, eval mode)."""
    compute_dtype = packed["t_w1"].dtype
    num_classes = packed["num_classes"]

    batch, d_t = text_emb.shape
    d_a = audio_emb.shape[1]
    h = packed["t_w1"].shape[1]
    c_pad = packed["t_w3"].shape[1]

    bt = batch_tile or _pick_batch_tile(batch, compute_dtype)
    b_pad = pl.cdiv(batch, bt) * bt
    if b_pad != batch:
        pad = ((0, b_pad - batch), (0, 0))
        text_emb = jnp.pad(text_emb, pad)
        audio_emb = jnp.pad(audio_emb, pad)

    grid = (b_pad // bt,)
    weights = (packed["t_w1"], packed["t_b1"], packed["t_w2"], packed["t_b2"],
               packed["t_w3"],
               packed["a_w1"], packed["a_b1"], packed["a_w2"], packed["a_b2"],
               packed["a_w3"], packed["b3"])

    vmem_limit = _vmem_limit_bytes(bt, d_t, d_a, h, c_pad, compute_dtype)

    def run(single_buffer_weights):
        def wspec(arr):
            # Grid-invariant operand: always block (0, 0); single-buffered so
            # only one VMEM copy of each weight is held.
            if single_buffer_weights:
                return pl.BlockSpec(arr.shape, lambda i: (0, 0),
                                    pipeline_mode=pl.Buffered(1))
            return pl.BlockSpec(arr.shape, lambda i: (0, 0))

        in_specs = [pl.BlockSpec((bt, d_t), lambda i: (i, 0)),   # text tile
                    pl.BlockSpec((bt, d_a), lambda i: (i, 0))]   # audio tile
        in_specs += [wspec(w) for w in weights]
        out_spec = pl.BlockSpec((bt, c_pad), lambda i: (i, 0))

        return pl.pallas_call(
            _late_fusion_kernel,
            out_shape=jax.ShapeDtypeStruct((b_pad, c_pad), jnp.float32),
            grid_spec=pltpu.PrefetchScalarGridSpec(
                num_scalar_prefetch=0,
                grid=grid,
                in_specs=in_specs,
                out_specs=out_spec,
            ),
            compiler_params=pltpu.CompilerParams(
                dimension_semantics=("parallel",),
                vmem_limit_bytes=vmem_limit),
        )(text_emb, audio_emb, *weights)

    try:
        out = run(single_buffer_weights=True)
    except Exception:
        # pipeline_mode=pl.Buffered(1) not supported on this jax build:
        # fall back to default double-buffered weights (correctness unchanged).
        out = run(single_buffer_weights=False)

    return out[:batch, :num_classes]


# ---------------------------------------------------------------------------
# Init + pure-JAX reference
# ---------------------------------------------------------------------------
def init_params(key, text_in, audio_in, hidden, num_classes):
    """Deterministic init mimicking nn.Linear (uniform +/- 1/sqrt(fan_in))."""
    def linear(k, fan_in, fan_out):
        kw, kb = jax.random.split(k)
        bound = 1.0 / (fan_in ** 0.5)
        w = jax.random.uniform(kw, (fan_in, fan_out), jnp.float32, -bound, bound)
        b = jax.random.uniform(kb, (1, fan_out), jnp.float32, -bound, bound)
        return w, b

    keys = jax.random.split(key, 6)
    t_w1, t_b1 = linear(keys[0], text_in, hidden)
    t_w2, t_b2 = linear(keys[1], hidden, hidden)
    t_w3, t_b3 = linear(keys[2], hidden, num_classes)
    a_w1, a_b1 = linear(keys[3], audio_in, hidden)
    a_w2, a_b2 = linear(keys[4], hidden, hidden)
    a_w3, a_b3 = linear(keys[5], hidden, num_classes)
    return dict(t_w1=t_w1, t_b1=t_b1, t_w2=t_w2, t_b2=t_b2, t_w3=t_w3, t_b3=t_b3,
                a_w1=a_w1, a_b1=a_b1, a_w2=a_w2, a_b2=a_b2, a_w3=a_w3, a_b3=a_b3)


def reference_forward(audio_emb, text_emb, p, compute_dtype=jnp.float32):
    """Pure-JAX reference matching the PyTorch module at eval time.

    compute_dtype lets us build a precision-matched reference for the bf16
    MXU path (f32 accumulation, f32 bias adds) as well as the exact f32 one.
    """
    cd = compute_dtype

    def mlp(x, w1, b1, w2, b2, w3, b3):
        h = jnp.dot(x.astype(cd), w1.astype(cd),
                    preferred_element_type=jnp.float32) + b1
        h = jnp.maximum(h, 0.0)
        h = jnp.dot(h.astype(cd), w2.astype(cd),
                    preferred_element_type=jnp.float32) + b2
        h = jnp.maximum(h, 0.0)
        return jnp.dot(h.astype(cd), w3.astype(cd),
                       preferred_element_type=jnp.float32) + b3

    tl = mlp(text_emb, p["t_w1"], p["t_b1"], p["t_w2"], p["t_b2"],
             p["t_w3"], p["t_b3"])
    al = mlp(audio_emb, p["a_w1"], p["a_b1"], p["a_w2"], p["a_b2"],
             p["a_w3"], p["a_b3"])
    return (al + tl) * 0.5


if __name__ == "__main__":
    # Small shapes consistent with the module (defaults scaled down):
    # batch=16, text_input=128, audio_input=128, hidden=128, num_classes=5.
    B, TEXT_IN, AUDIO_IN, HIDDEN, NUM_CLASSES = 16, 128, 128, 128, 5

    key = jax.random.PRNGKey(0)
    k_text, k_audio, k_params = jax.random.split(key, 3)
    text_emb = jax.random.normal(k_text, (B, TEXT_IN), jnp.float32)
    audio_emb = jax.random.normal(k_audio, (B, AUDIO_IN), jnp.float32)
    params = init_params(k_params, TEXT_IN, AUDIO_IN, HIDDEN, NUM_CLASSES)

    packed = pack_params(params, compute_dtype=jnp.bfloat16)
    out = late_fusion_forward(audio_emb, text_emb, packed)
    out = jax.block_until_ready(out)
    assert out.shape == (B, NUM_CLASSES)

    # Precision-matched reference (same bf16 MXU inputs, f32 accumulation).
    ref_bf16 = reference_forward(audio_emb, text_emb, params,
                                 compute_dtype=jnp.bfloat16)
    assert jnp.allclose(out, ref_bf16, atol=2e-3, rtol=2e-3), (
        float(jnp.max(jnp.abs(out - ref_bf16))))

    # Loose sanity check against the exact f32 eval-mode reference.
    ref_f32 = reference_forward(audio_emb, text_emb, params)
    assert jnp.allclose(out, ref_f32, atol=1e-1, rtol=1e-1), (
        float(jnp.max(jnp.abs(out - ref_f32))))

    # Exercise the padding path (non-aligned batch -> padded to 32, 1 step).
    B2 = 20
    te2 = jax.random.normal(jax.random.PRNGKey(1), (B2, TEXT_IN), jnp.float32)
    ae2 = jax.random.normal(jax.random.PRNGKey(2), (B2, AUDIO_IN), jnp.float32)
    out2 = jax.block_until_ready(late_fusion_forward(ae2, te2, packed))
    ref2 = reference_forward(ae2, te2, params, compute_dtype=jnp.bfloat16)
    assert out2.shape == (B2, NUM_CLASSES)
    assert jnp.allclose(out2, ref2, atol=2e-3, rtol=2e-3), (
        float(jnp.max(jnp.abs(out2 - ref2))))

    print("KERNEL_OK")
</pallas_src>

<mosaic_0001>
module attributes {stable_mosaic.version = 11 : i64} {
  func.func @_late_fusion_kernel(%arg0: i32, %arg1: memref<16x128xf32, #tpu.memory_space<vmem>>, %arg2: memref<16x128xf32, #tpu.memory_space<vmem>>, %arg3: memref<128x128xbf16, #tpu.memory_space<vmem>>, %arg4: memref<1x128xf32, #tpu.memory_space<vmem>>, %arg5: memref<128x128xbf16, #tpu.memory_space<vmem>>, %arg6: memref<1x128xf32, #tpu.memory_space<vmem>>, %arg7: memref<128x128xbf16, #tpu.memory_space<vmem>>, %arg8: memref<128x128xbf16, #tpu.memory_space<vmem>>, %arg9: memref<1x128xf32, #tpu.memory_space<vmem>>, %arg10: memref<128x128xbf16, #tpu.memory_space<vmem>>, %arg11: memref<1x128xf32, #tpu.memory_space<vmem>>, %arg12: memref<128x128xbf16, #tpu.memory_space<vmem>>, %arg13: memref<1x128xf32, #tpu.memory_space<vmem>>, %arg14: memref<16x128xf32, #tpu.memory_space<vmem>>) attributes {dimension_semantics = [#tpu.dimension_semantics<parallel>], iteration_bounds = array<i64: 1>, scalar_prefetch = 0 : i64, scratch_operands = 0 : i64, tpu.core_type = #tpu.core_type<tc>, window_params = [{transform_indices = @transform_0, window_bounds = array<i64: 16, 128>}, {transform_indices = @transform_1, window_bounds = array<i64: 16, 128>}, {pipeline_mode = #tpu.pipeline_mode<synchronous>, transform_indices = @transform_2, window_bounds = array<i64: 128, 128>}, {pipeline_mode = #tpu.pipeline_mode<synchronous>, transform_indices = @transform_3, window_bounds = array<i64: 1, 128>}, {pipeline_mode = #tpu.pipeline_mode<synchronous>, transform_indices = @transform_4, window_bounds = array<i64: 128, 128>}, {pipeline_mode = #tpu.pipeline_mode<synchronous>, transform_indices = @transform_5, window_bounds = array<i64: 1, 128>}, {pipeline_mode = #tpu.pipeline_mode<synchronous>, transform_indices = @transform_6, window_bounds = array<i64: 128, 128>}, {pipeline_mode = #tpu.pipeline_mode<synchronous>, transform_indices = @transform_7, window_bounds = array<i64: 128, 128>}, {pipeline_mode = #tpu.pipeline_mode<synchronous>, transform_indices = @transform_8, window_bounds = array<i64: 1, 128>}, {pipeline_mode = #tpu.pipeline_mode<synchronous>, transform_indices = @transform_9, window_bounds = array<i64: 128, 128>}, {pipeline_mode = #tpu.pipeline_mode<synchronous>, transform_indices = @transform_10, window_bounds = array<i64: 1, 128>}, {pipeline_mode = #tpu.pipeline_mode<synchronous>, transform_indices = @transform_11, window_bounds = array<i64: 128, 128>}, {pipeline_mode = #tpu.pipeline_mode<synchronous>, transform_indices = @transform_12, window_bounds = array<i64: 1, 128>}, {transform_indices = @transform_13, window_bounds = array<i64: 16, 128>}]} {
    %c0 = arith.constant 0 : index
    %c0_0 = arith.constant 0 : index
    %0 = vector.load %arg1[%c0, %c0_0] : memref<16x128xf32, #tpu.memory_space<vmem>>, vector<16x128xf32>
    %1 = arith.truncf %0 : vector<16x128xf32> to vector<16x128xbf16>
    %c0_1 = arith.constant 0 : index
    %c0_2 = arith.constant 0 : index
    %2 = vector.load %arg3[%c0_1, %c0_2] : memref<128x128xbf16, #tpu.memory_space<vmem>>, vector<128x128xbf16>
    %cst = arith.constant dense<0.000000e+00> : vector<16x128xf32>
    %3 = tpu.matmul %1, %2, %cst {dimension_numbers = #tpu.dot_dimension_numbers<[1], [0], [0], [1], [0, 0, 1, 1], [], []>} : vector<16x128xbf16>, vector<128x128xbf16>, vector<16x128xf32> -> vector<16x128xf32>
    %c0_3 = arith.constant 0 : index
    %c0_4 = arith.constant 0 : index
    %4 = vector.load %arg4[%c0_3, %c0_4] : memref<1x128xf32, #tpu.memory_space<vmem>>, vector<1x128xf32>
    %5 = vector.broadcast %4 : vector<1x128xf32> to vector<16x128xf32>
    %6 = arith.addf %3, %5 : vector<16x128xf32>
    %cst_5 = arith.constant 0.000000e+00 : f32
    %7 = vector.broadcast %cst_5 : f32 to vector<16x128xf32>
    %8 = arith.maximumf %6, %7 : vector<16x128xf32>
    %9 = arith.truncf %8 : vector<16x128xf32> to vector<16x128xbf16>
    %c0_6 = arith.constant 0 : index
    %c0_7 = arith.constant 0 : index
    %10 = vector.load %arg5[%c0_6, %c0_7] : memref<128x128xbf16, #tpu.memory_space<vmem>>, vector<128x128xbf16>
    %cst_8 = arith.constant dense<0.000000e+00> : vector<16x128xf32>
    %11 = tpu.matmul %9, %10, %cst_8 {dimension_numbers = #tpu.dot_dimension_numbers<[1], [0], [0], [1], [0, 0, 1, 1], [], []>} : vector<16x128xbf16>, vector<128x128xbf16>, vector<16x128xf32> -> vector<16x128xf32>
    %c0_9 = arith.constant 0 : index
    %c0_10 = arith.constant 0 : index
    %12 = vector.load %arg6[%c0_9, %c0_10] : memref<1x128xf32, #tpu.memory_space<vmem>>, vector<1x128xf32>
    %13 = vector.broadcast %12 : vector<1x128xf32> to vector<16x128xf32>
    %14 = arith.addf %11, %13 : vector<16x128xf32>
    %cst_11 = arith.constant 0.000000e+00 : f32
    %15 = vector.broadcast %cst_11 : f32 to vector<16x128xf32>
    %16 = arith.maximumf %14, %15 : vector<16x128xf32>
    %17 = arith.truncf %16 : vector<16x128xf32> to vector<16x128xbf16>
    %c0_12 = arith.constant 0 : index
    %c0_13 = arith.constant 0 : index
    %18 = vector.load %arg2[%c0_12, %c0_13] : memref<16x128xf32, #tpu.memory_space<vmem>>, vector<16x128xf32>
    %19 = arith.truncf %18 : vector<16x128xf32> to vector<16x128xbf16>
    %c0_14 = arith.constant 0 : index
    %c0_15 = arith.constant 0 : index
    %20 = vector.load %arg8[%c0_14, %c0_15] : memref<128x128xbf16, #tpu.memory_space<vmem>>, vector<128x128xbf16>
    %cst_16 = arith.constant dense<0.000000e+00> : vector<16x128xf32>
    %21 = tpu.matmul %19, %20, %cst_16 {dimension_numbers = #tpu.dot_dimension_numbers<[1], [0], [0], [1], [0, 0, 1, 1], [], []>} : vector<16x128xbf16>, vector<128x128xbf16>, vector<16x128xf32> -> vector<16x128xf32>
    %c0_17 = arith.constant 0 : index
    %c0_18 = arith.constant 0 : index
    %22 = vector.load %arg9[%c0_17, %c0_18] : memref<1x128xf32, #tpu.memory_space<vmem>>, vector<1x128xf32>
    %23 = vector.broadcast %22 : vector<1x128xf32> to vector<16x128xf32>
    %24 = arith.addf %21, %23 : vector<16x128xf32>
    %cst_19 = arith.constant 0.000000e+00 : f32
    %25 = vector.broadcast %cst_19 : f32 to vector<16x128xf32>
    %26 = arith.maximumf %24, %25 : vector<16x128xf32>
    %27 = arith.truncf %26 : vector<16x128xf32> to vector<16x128xbf16>
    %c0_20 = arith.constant 0 : index
    %c0_21 = arith.constant 0 : index
    %28 = vector.load %arg10[%c0_20, %c0_21] : memref<128x128xbf16, #tpu.memory_space<vmem>>, vector<128x128xbf16>
    %cst_22 = arith.constant dense<0.000000e+00> : vector<16x128xf32>
    %29 = tpu.matmul %27, %28, %cst_22 {dimension_numbers = #tpu.dot_dimension_numbers<[1], [0], [0], [1], [0, 0, 1, 1], [], []>} : vector<16x128xbf16>, vector<128x128xbf16>, vector<16x128xf32> -> vector<16x128xf32>
    %c0_23 = arith.constant 0 : index
    %c0_24 = arith.constant 0 : index
    %30 = vector.load %arg11[%c0_23, %c0_24] : memref<1x128xf32, #tpu.memory_space<vmem>>, vector<1x128xf32>
    %31 = vector.broadcast %30 : vector<1x128xf32> to vector<16x128xf32>
    %32 = arith.addf %29, %31 : vector<16x128xf32>
    %cst_25 = arith.constant 0.000000e+00 : f32
    %33 = vector.broadcast %cst_25 : f32 to vector<16x128xf32>
    %34 = arith.maximumf %32, %33 : vector<16x128xf32>
    %35 = arith.truncf %34 : vector<16x128xf32> to vector<16x128xbf16>
    %c0_26 = arith.constant 0 : index
    %c0_27 = arith.constant 0 : index
    %36 = vector.load %arg7[%c0_26, %c0_27] : memref<128x128xbf16, #tpu.memory_space<vmem>>, vector<128x128xbf16>
    %cst_28 = arith.constant dense<0.000000e+00> : vector<16x128xf32>
    %37 = tpu.matmul %17, %36, %cst_28 {dimension_numbers = #tpu.dot_dimension_numbers<[1], [0], [0], [1], [0, 0, 1, 1], [], []>} : vector<16x128xbf16>, vector<128x128xbf16>, vector<16x128xf32> -> vector<16x128xf32>
    %c0_29 = arith.constant 0 : index
    %c0_30 = arith.constant 0 : index
    %38 = vector.load %arg12[%c0_29, %c0_30] : memref<128x128xbf16, #tpu.memory_space<vmem>>, vector<128x128xbf16>
    %cst_31 = arith.constant dense<0.000000e+00> : vector<16x128xf32>
    %39 = tpu.matmul %35, %38, %cst_31 {dimension_numbers = #tpu.dot_dimension_numbers<[1], [0], [0], [1], [0, 0, 1, 1], [], []>} : vector<16x128xbf16>, vector<128x128xbf16>, vector<16x128xf32> -> vector<16x128xf32>
    %40 = arith.addf %37, %39 : vector<16x128xf32>
    %c0_32 = arith.constant 0 : index
    %c0_33 = arith.constant 0 : index
    %41 = vector.load %arg13[%c0_32, %c0_33] : memref<1x128xf32, #tpu.memory_space<vmem>>, vector<1x128xf32>
    %42 = vector.broadcast %41 : vector<1x128xf32> to vector<16x128xf32>
    %43 = arith.addf %40, %42 : vector<16x128xf32>
    %c0_34 = arith.constant 0 : index
    %c0_35 = arith.constant 0 : index
    %44 = vector.load %arg14[%c0_34, %c0_35] : memref<16x128xf32, #tpu.memory_space<vmem>>, vector<16x128xf32>
    tpu.vector_store %arg14[%c0_34, %c0_35], %43 {strides = array<i32>} : memref<16x128xf32, #tpu.memory_space<vmem>>, vector<16x128xf32>,
    return
  }
  func.func @transform_0(%arg0: i32) -> (i32, i32) {
    %c0_i32 = arith.constant 0 : i32
    %c0_i32_0 = arith.constant 0 : i32
    return %arg0, %c0_i32 : i32, i32
  }
  func.func @transform_1(%arg0: i32) -> (i32, i32) {
    %c0_i32 = arith.constant 0 : i32
    %c0_i32_0 = arith.constant 0 : i32
    return %arg0, %c0_i32 : i32, i32
  }
  func.func @transform_2(%arg0: i32) -> (i32, i32) {
    %c0_i32 = arith.constant 0 : i32
    %c0_i32_0 = arith.constant 0 : i32
    %c0_i32_1 = arith.constant 0 : i32
    return %c0_i32, %c0_i32_0 : i32, i32
  }
  func.func @transform_3(%arg0: i32) -> (i32, i32) {
    %c0_i32 = arith.constant 0 : i32
    %c0_i32_0 = arith.constant 0 : i32
    %c0_i32_1 = arith.constant 0 : i32
    return %c0_i32, %c0_i32_0 : i32, i32
  }
  func.func @transform_4(%arg0: i32) -> (i32, i32) {
    %c0_i32 = arith.constant 0 : i32
    %c0_i32_0 = arith.constant 0 : i32
    %c0_i32_1 = arith.constant 0 : i32
    return %c0_i32, %c0_i32_0 : i32, i32
  }
  func.func @transform_5(%arg0: i32) -> (i32, i32) {
    %c0_i32 = arith.constant 0 : i32
    %c0_i32_0 = arith.constant 0 : i32
    %c0_i32_1 = arith.constant 0 : i32
    return %c0_i32, %c0_i32_0 : i32, i32
  }
  func.func @transform_6(%arg0: i32) -> (i32, i32) {
    %c0_i32 = arith.constant 0 : i32
    %c0_i32_0 = arith.constant 0 : i32
    %c0_i32_1 = arith.constant 0 : i32
    return %c0_i32, %c0_i32_0 : i32, i32
  }
  func.func @transform_7(%arg0: i32) -> (i32, i32) {
    %c0_i32 = arith.constant 0 : i32
    %c0_i32_0 = arith.constant 0 : i32
    %c0_i32_1 = arith.constant 0 : i32
    return %c0_i32, %c0_i32_0 : i32, i32
  }
  func.func @transform_8(%arg0: i32) -> (i32, i32) {
    %c0_i32 = arith.constant 0 : i32
    %c0_i32_0 = arith.constant 0 : i32
    %c0_i32_1 = arith.constant 0 : i32
    return %c0_i32, %c0_i32_0 : i32, i32
  }
  func.func @transform_9(%arg0: i32) -> (i32, i32) {
    %c0_i32 = arith.constant 0 : i32
    %c0_i32_0 = arith.constant 0 : i32
    %c0_i32_1 = arith.constant 0 : i32
    return %c0_i32, %c0_i32_0 : i32, i32
  }
  func.func @transform_10(%arg0: i32) -> (i32, i32) {
    %c0_i32 = arith.constant 0 : i32
    %c0_i32_0 = arith.constant 0 : i32
    %c0_i32_1 = arith.constant 0 : i32
    return %c0_i32, %c0_i32_0 : i32, i32
  }
  func.func @transform_11(%arg0: i32) -> (i32, i32) {
    %c0_i32 = arith.constant 0 : i32
    %c0_i32_0 = arith.constant 0 : i32
    %c0_i32_1 = arith.constant 0 : i32
    return %c0_i32, %c0_i32_0 : i32, i32
  }
  func.func @transform_12(%arg0: i32) -> (i32, i32) {
    %c0_i32 = arith.constant 0 : i32
    %c0_i32_0 = arith.constant 0 : i32
    %c0_i32_1 = arith.constant 0 : i32
    return %c0_i32, %c0_i32_0 : i32, i32
  }
  func.func @transform_13(%arg0: i32) -> (i32, i32) {
    %c0_i32 = arith.constant 0 : i32
    %c0_i32_0 = arith.constant 0 : i32
    return %arg0, %c0_i32 : i32, i32
  }
}

module attributes {stable_mosaic.version = 11 : i64} {
  func.func @_late_fusion_kernel(%arg0: i32, %arg1: memref<16x128xf32, #tpu.memory_space<vmem>>, %arg2: memref<16x128xf32, #tpu.memory_space<vmem>>, %arg3: memref<128x128xbf16, #tpu.memory_space<vmem>>, %arg4: memref<1x128xf32, #tpu.memory_space<vmem>>, %arg5: memref<128x128xbf16, #tpu.memory_space<vmem>>, %arg6: memref<1x128xf32, #tpu.memory_space<vmem>>, %arg7: memref<128x128xbf16, #tpu.memory_space<vmem>>, %arg8: memref<128x128xbf16, #tpu.memory_space<vmem>>, %arg9: memref<1x128xf32, #tpu.memory_space<vmem>>, %arg10: memref<128x128xbf16, #tpu.memory_space<vmem>>, %arg11: memref<1x128xf32, #tpu.memory_space<vmem>>, %arg12: memref<128x128xbf16, #tpu.memory_space<vmem>>, %arg13: memref<1x128xf32, #tpu.memory_space<vmem>>, %arg14: memref<16x128xf32, #tpu.memory_space<vmem>>) attributes {dimension_semantics = [#tpu.dimension_semantics<parallel>], iteration_bounds = array<i64: 1>, scalar_prefetch = 0 : i64, scratch_operands = 0 : i64, tpu.core_type = #tpu.core_type<tc>, window_params = [{transform_indices = @transform_0, window_bounds = array<i64: 16, 128>}, {transform_indices = @transform_1, window_bounds = array<i64: 16, 128>}, {pipeline_mode = #tpu.pipeline_mode<synchronous>, transform_indices = @transform_2, window_bounds = array<i64: 128, 128>}, {pipeline_mode = #tpu.pipeline_mode<synchronous>, transform_indices = @transform_3, window_bounds = array<i64: 1, 128>}, {pipeline_mode = #tpu.pipeline_mode<synchronous>, transform_indices = @transform_4, window_bounds = array<i64: 128, 128>}, {pipeline_mode = #tpu.pipeline_mode<synchronous>, transform_indices = @transform_5, window_bounds = array<i64: 1, 128>}, {pipeline_mode = #tpu.pipeline_mode<synchronous>, transform_indices = @transform_6, window_bounds = array<i64: 128, 128>}, {pipeline_mode = #tpu.pipeline_mode<synchronous>, transform_indices = @transform_7, window_bounds = array<i64: 128, 128>}, {pipeline_mode = #tpu.pipeline_mode<synchronous>, transform_indices = @transform_8, window_bounds = array<i64: 1, 128>}, {pipeline_mode = #tpu.pipeline_mode<synchronous>, transform_indices = @transform_9, window_bounds = array<i64: 128, 128>}, {pipeline_mode = #tpu.pipeline_mode<synchronous>, transform_indices = @transform_10, window_bounds = array<i64: 1, 128>}, {pipeline_mode = #tpu.pipeline_mode<synchronous>, transform_indices = @transform_11, window_bounds = array<i64: 128, 128>}, {pipeline_mode = #tpu.pipeline_mode<synchronous>, transform_indices = @transform_12, window_bounds = array<i64: 1, 128>}, {transform_indices = @transform_13, window_bounds = array<i64: 16, 128>}]} {
    %c0 = arith.constant 0 : index
    %c0_0 = arith.constant 0 : index
    %0 = vector.load %arg1[%c0, %c0_0] : memref<16x128xf32, #tpu.memory_space<vmem>>, vector<16x128xf32>
    %1 = arith.truncf %0 : vector<16x128xf32> to vector<16x128xbf16>
    %c0_1 = arith.constant 0 : index
    %c0_2 = arith.constant 0 : index
    %2 = vector.load %arg3[%c0_1, %c0_2] : memref<128x128xbf16, #tpu.memory_space<vmem>>, vector<128x128xbf16>
    %cst = arith.constant dense<0.000000e+00> : vector<16x128xf32>
    %3 = tpu.matmul %1, %2, %cst {dimension_numbers = #tpu.dot_dimension_numbers<[1], [0], [0], [1], [0, 0, 1, 1], [], []>} : vector<16x128xbf16>, vector<128x128xbf16>, vector<16x128xf32> -> vector<16x128xf32>
    %c0_3 = arith.constant 0 : index
    %c0_4 = arith.constant 0 : index
    %4 = vector.load %arg4[%c0_3, %c0_4] : memref<1x128xf32, #tpu.memory_space<vmem>>, vector<1x128xf32>
    %5 = vector.broadcast %4 : vector<1x128xf32> to vector<16x128xf32>
    %6 = arith.addf %3, %5 : vector<16x128xf32>
    %cst_5 = arith.constant 0.000000e+00 : f32
    %7 = vector.broadcast %cst_5 : f32 to vector<16x128xf32>
    %8 = arith.maximumf %6, %7 : vector<16x128xf32>
    %9 = arith.truncf %8 : vector<16x128xf32> to vector<16x128xbf16>
    %c0_6 = arith.constant 0 : index
    %c0_7 = arith.constant 0 : index
    %10 = vector.load %arg5[%c0_6, %c0_7] : memref<128x128xbf16, #tpu.memory_space<vmem>>, vector<128x128xbf16>
    %cst_8 = arith.constant dense<0.000000e+00> : vector<16x128xf32>
    %11 = tpu.matmul %9, %10, %cst_8 {dimension_numbers = #tpu.dot_dimension_numbers<[1], [0], [0], [1], [0, 0, 1, 1], [], []>} : vector<16x128xbf16>, vector<128x128xbf16>, vector<16x128xf32> -> vector<16x128xf32>
    %c0_9 = arith.constant 0 : index
    %c0_10 = arith.constant 0 : index
    %12 = vector.load %arg6[%c0_9, %c0_10] : memref<1x128xf32, #tpu.memory_space<vmem>>, vector<1x128xf32>
    %13 = vector.broadcast %12 : vector<1x128xf32> to vector<16x128xf32>
    %14 = arith.addf %11, %13 : vector<16x128xf32>
    %cst_11 = arith.constant 0.000000e+00 : f32
    %15 = vector.broadcast %cst_11 : f32 to vector<16x128xf32>
    %16 = arith.maximumf %14, %15 : vector<16x128xf32>
    %17 = arith.truncf %16 : vector<16x128xf32> to vector<16x128xbf16>
    %c0_12 = arith.constant 0 : index
    %c0_13 = arith.constant 0 : index
    %18 = vector.load %arg2[%c0_12, %c0_13] : memref<16x128xf32, #tpu.memory_space<vmem>>, vector<16x128xf32>
    %19 = arith.truncf %18 : vector<16x128xf32> to vector<16x128xbf16>
    %c0_14 = arith.constant 0 : index
    %c0_15 = arith.constant 0 : index
    %20 = vector.load %arg8[%c0_14, %c0_15] : memref<128x128xbf16, #tpu.memory_space<vmem>>, vector<128x128xbf16>
    %cst_16 = arith.constant dense<0.000000e+00> : vector<16x128xf32>
    %21 = tpu.matmul %19, %20, %cst_16 {dimension_numbers = #tpu.dot_dimension_numbers<[1], [0], [0], [1], [0, 0, 1, 1], [], []>} : vector<16x128xbf16>, vector<128x128xbf16>, vector<16x128xf32> -> vector<16x128xf32>
    %c0_17 = arith.constant 0 : index
    %c0_18 = arith.constant 0 : index
    %22 = vector.load %arg9[%c0_17, %c0_18] : memref<1x128xf32, #tpu.memory_space<vmem>>, vector<1x128xf32>
    %23 = vector.broadcast %22 : vector<1x128xf32> to vector<16x128xf32>
    %24 = arith.addf %21, %23 : vector<16x128xf32>
    %cst_19 = arith.constant 0.000000e+00 : f32
    %25 = vector.broadcast %cst_19 : f32 to vector<16x128xf32>
    %26 = arith.maximumf %24, %25 : vector<16x128xf32>
    %27 = arith.truncf %26 : vector<16x128xf32> to vector<16x128xbf16>
    %c0_20 = arith.constant 0 : index
    %c0_21 = arith.constant 0 : index
    %28 = vector.load %arg10[%c0_20, %c0_21] : memref<128x128xbf16, #tpu.memory_space<vmem>>, vector<128x128xbf16>
    %cst_22 = arith.constant dense<0.000000e+00> : vector<16x128xf32>
    %29 = tpu.matmul %27, %28, %cst_22 {dimension_numbers = #tpu.dot_dimension_numbers<[1], [0], [0], [1], [0, 0, 1, 1], [], []>} : vector<16x128xbf16>, vector<128x128xbf16>, vector<16x128xf32> -> vector<16x128xf32>
    %c0_23 = arith.constant 0 : index
    %c0_24 = arith.constant 0 : index
    %30 = vector.load %arg11[%c0_23, %c0_24] : memref<1x128xf32, #tpu.memory_space<vmem>>, vector<1x128xf32>
    %31 = vector.broadcast %30 : vector<1x128xf32> to vector<16x128xf32>
    %32 = arith.addf %29, %31 : vector<16x128xf32>
    %cst_25 = arith.constant 0.000000e+00 : f32
    %33 = vector.broadcast %cst_25 : f32 to vector<16x128xf32>
    %34 = arith.maximumf %32, %33 : vector<16x128xf32>
    %35 = arith.truncf %34 : vector<16x128xf32> to vector<16x128xbf16>
    %c0_26 = arith.constant 0 : index
    %c0_27 = arith.constant 0 : index
    %36 = vector.load %arg7[%c0_26, %c0_27] : memref<128x128xbf16, #tpu.memory_space<vmem>>, vector<128x128xbf16>
    %cst_28 = arith.constant dense<0.000000e+00> : vector<16x128xf32>
    %37 = tpu.matmul %17, %36, %cst_28 {dimension_numbers = #tpu.dot_dimension_numbers<[1], [0], [0], [1], [0, 0, 1, 1], [], []>} : vector<16x128xbf16>, vector<128x128xbf16>, vector<16x128xf32> -> vector<16x128xf32>
    %c0_29 = arith.constant 0 : index
    %c0_30 = arith.constant 0 : index
    %38 = vector.load %arg12[%c0_29, %c0_30] : memref<128x128xbf16, #tpu.memory_space<vmem>>, vector<128x128xbf16>
    %cst_31 = arith.constant dense<0.000000e+00> : vector<16x128xf32>
    %39 = tpu.matmul %35, %38, %cst_31 {dimension_numbers = #tpu.dot_dimension_numbers<[1], [0], [0], [1], [0, 0, 1, 1], [], []>} : vector<16x128xbf16>, vector<128x128xbf16>, vector<16x128xf32> -> vector<16x128xf32>
    %40 = arith.addf %37, %39 : vector<16x128xf32>
    %c0_32 = arith.constant 0 : index
    %c0_33 = arith.constant 0 : index
    %41 = vector.load %arg13[%c0_32, %c0_33] : memref<1x128xf32, #tpu.memory_space<vmem>>, vector<1x128xf32>
    %42 = vector.broadcast %41 : vector<1x128xf32> to vector<16x128xf32>
    %43 = arith.addf %40, %42 : vector<16x128xf32>
    %c0_34 = arith.constant 0 : index
    %c0_35 = arith.constant 0 : index
    %44 = vector.load %arg14[%c0_34, %c0_35] : memref<16x128xf32, #tpu.memory_space<vmem>>, vector<16x128xf32>
    tpu.vector_store %arg14[%c0_34, %c0_35], %43 {strides = array<i32>} : memref<16x128xf32, #tpu.memory_space<vmem>>, vector<16x128xf32>,
    return
  }
  func.func @transform_0(%arg0: i32) -> (i32, i32) {
    %c0_i32 = arith.constant 0 : i32
    %c0_i32_0 = arith.constant 0 : i32
    return %arg0, %c0_i32 : i32, i32
  }
  func.func @transform_1(%arg0: i32) -> (i32, i32) {
    %c0_i32 = arith.constant 0 : i32
    %c0_i32_0 = arith.constant 0 : i32
    return %arg0, %c0_i32 : i32, i32
  }
  func.func @transform_2(%arg0: i32) -> (i32, i32) {
    %c0_i32 = arith.constant 0 : i32
    %c0_i32_0 = arith.constant 0 : i32
    %c0_i32_1 = arith.constant 0 : i32
    return %c0_i32, %c0_i32_0 : i32, i32
  }
  func.func @transform_3(%arg0: i32) -> (i32, i32) {
    %c0_i32 = arith.constant 0 : i32
    %c0_i32_0 = arith.constant 0 : i32
    %c0_i32_1 = arith.constant 0 : i32
    return %c0_i32, %c0_i32_0 : i32, i32
  }
  func.func @transform_4(%arg0: i32) -> (i32, i32) {
    %c0_i32 = arith.constant 0 : i32
    %c0_i32_0 = arith.constant 0 : i32
    %c0_i32_1 = arith.constant 0 : i32
    return %c0_i32, %c0_i32_0 : i32, i32
  }
  func.func @transform_5(%arg0: i32) -> (i32, i32) {
    %c0_i32 = arith.constant 0 : i32
    %c0_i32_0 = arith.constant 0 : i32
    %c0_i32_1 = arith.constant 0 : i32
    return %c0_i32, %c0_i32_0 : i32, i32
  }
  func.func @transform_6(%arg0: i32) -> (i32, i32) {
    %c0_i32 = arith.constant 0 : i32
    %c0_i32_0 = arith.constant 0 : i32
    %c0_i32_1 = arith.constant 0 : i32
    return %c0_i32, %c0_i32_0 : i32, i32
  }
  func.func @transform_7(%arg0: i32) -> (i32, i32) {
    %c0_i32 = arith.constant 0 : i32
    %c0_i32_0 = arith.constant 0 : i32
    %c0_i32_1 = arith.constant 0 : i32
    return %c0_i32, %c0_i32_0 : i32, i32
  }
  func.func @transform_8(%arg0: i32) -> (i32, i32) {
    %c0_i32 = arith.constant 0 : i32
    %c0_i32_0 = arith.constant 0 : i32
    %c0_i32_1 = arith.constant 0 : i32
    return %c0_i32, %c0_i32_0 : i32, i32
  }
  func.func @transform_9(%arg0: i32) -> (i32, i32) {
    %c0_i32 = arith.constant 0 : i32
    %c0_i32_0 = arith.constant 0 : i32
    %c0_i32_1 = arith.constant 0 : i32
    return %c0_i32, %c0_i32_0 : i32, i32
  }
  func.func @transform_10(%arg0: i32) -> (i32, i32) {
    %c0_i32 = arith.constant 0 : i32
    %c0_i32_0 = arith.constant 0 : i32
    %c0_i32_1 = arith.constant 0 : i32
    return %c0_i32, %c0_i32_0 : i32, i32
  }
  func.func @transform_11(%arg0: i32) -> (i32, i32) {
    %c0_i32 = arith.constant 0 : i32
    %c0_i32_0 = arith.constant 0 : i32
    %c0_i32_1 = arith.constant 0 : i32
    return %c0_i32, %c0_i32_0 : i32, i32
  }
  func.func @transform_12(%arg0: i32) -> (i32, i32) {
    %c0_i32 = arith.constant 0 : i32
    %c0_i32_0 = arith.constant 0 : i32
    %c0_i32_1 = arith.constant 0 : i32
    return %c0_i32, %c0_i32_0 : i32, i32
  }
  func.func @transform_13(%arg0: i32) -> (i32, i32) {
    %c0_i32 = arith.constant 0 : i32
    %c0_i32_0 = arith.constant 0 : i32
    return %arg0, %c0_i32 : i32, i32
  }
}

</mosaic_0001>

<llo_original>
// kernel: tpu_custom_call.1
$region0: #{tpu_custom_call.1}
  #allocation0 [shape = 'u32[]', space=smem, size = 0x4, offset = 0x4, fixed_abs, tag = 'smem constant byte address 0x4 - core index']
  #allocation1 [shape = 'u32[72,128]{1,0:T(1,128)}', space=vmem, size = 0x9000, scoped, tag = 'internal scratch']
  %s0 = inlined_call_operand.hbm [shape: f32[16,128], index: 0, kind: input, shape index: {}]
  %s1 = inlined_call_operand.hbm [shape: f32[16,128], index: 1, kind: input, shape index: {}]
  %s2 = inlined_call_operand.hbm [shape: bf16[128,128], index: 2, kind: input, shape index: {}]
  %s3 = inlined_call_operand.vmem [shape: f32[1,128], index: 3, kind: input, shape index: {}]
  %s4 = inlined_call_operand.hbm [shape: bf16[128,128], index: 4, kind: input, shape index: {}]
  %s5 = inlined_call_operand.vmem [shape: f32[1,128], index: 5, kind: input, shape index: {}]
  %s6 = inlined_call_operand.hbm [shape: bf16[128,128], index: 6, kind: input, shape index: {}]
  %s7 = inlined_call_operand.hbm [shape: bf16[128,128], index: 7, kind: input, shape index: {}]
  %s8 = inlined_call_operand.vmem [shape: f32[1,128], index: 8, kind: input, shape index: {}]
  %s9 = inlined_call_operand.hbm [shape: bf16[128,128], index: 9, kind: input, shape index: {}]
  %s10 = inlined_call_operand.vmem [shape: f32[1,128], index: 10, kind: input, shape index: {}]
  %s11 = inlined_call_operand.hbm [shape: bf16[128,128], index: 11, kind: input, shape index: {}]
  %s12 = inlined_call_operand.vmem [shape: f32[1,128], index: 12, kind: input, shape index: {}]
  %s13 = inlined_call_operand.hbm [shape: f32[16,128], index: 13, kind: output, shape index: {}]
  %s14 = sld [smem:[#allocation0]]
  $region94: #{tpu_custom_call.1} parent=0
    _
  %s16 = ssub.s32 1, %s14
  %s17 = scalar_select 0, %s16, %s14
  $region1: #{tpu_custom_call.1} parent=0
    #allocation2 [shape = 'u8[8192]{0}', space=vmem, size = 0x2000, scoped, tag = 'input window, operand 0, single buffered']
    #allocation3 [shape = 's32[1]{0}', space=sflag, size = 0x4, scoped, tag = 'scoped memory for tpu_custom_call.1']
    #allocation4 [shape = 's32[1]{0}', space=sflag, size = 0x4, scoped, tag = 'scoped memory for tpu_custom_call.1']
    #allocation5 [shape = 'u8[8192]{0}', space=vmem, size = 0x2000, scoped, tag = 'input window, operand 1, single buffered']
    #allocation6 [shape = 's32[1]{0}', space=sflag, size = 0x4, scoped, tag = 'scoped memory for tpu_custom_call.1']
    #allocation7 [shape = 'u8[32768]{0}', space=vmem, size = 0x8000, scoped, tag = 'input window, operand 2, single buffered']
    #allocation8 [shape = 'u8[32768]{0}', space=vmem, size = 0x8000, scoped, tag = 'input window, operand 4, single buffered']
    #allocation9 [shape = 's32[1]{0}', space=sflag, size = 0x4, scoped, tag = 'scoped memory for tpu_custom_call.1']
    #allocation10 [shape = 'u8[32768]{0}', space=vmem, size = 0x8000, scoped, tag = 'input window, operand 6, single buffered']
    #allocation11 [shape = 'u8[32768]{0}', space=vmem, size = 0x8000, scoped, tag = 'input window, operand 7, single buffered']
    #allocation12 [shape = 's32[1]{0}', space=sflag, size = 0x4, scoped, tag = 'scoped memory for tpu_custom_call.1']
    #allocation13 [shape = 'u8[32768]{0}', space=vmem, size = 0x8000, scoped, tag = 'input window, operand 9, single buffered']
    #allocation14 [shape = 'u8[32768]{0}', space=vmem, size = 0x8000, scoped, tag = 'input window, operand 11, single buffered']
    #allocation15 [shape = 's32[1]{0}', space=sflag, size = 0x4, scoped, tag = 'scoped memory for tpu_custom_call.1']
    #allocation16 [shape = 'u8[8192]{0}', space=vmem, size = 0x2000, scoped, tag = 'output window, operand 0, single buffered']
    %18 = vsyncpa [#allocation3], 0
    %19 = vsyncpa [#allocation6], 0
    %20 = vsyncpa [#allocation9], 0
    %21 = vsyncpa [#allocation12], 0
    %22 = vsyncpa [#allocation15], 0
    %23 = vsyncpa [#allocation4], 0
    // Predicated region
    $region2: #{tpu_custom_call.1} parent=1 // pred_check
      _
    $region3: #{tpu_custom_call.1} parent=1 // pred_check_branch
      %25 = sbr.rel (0) target = $region5
    $region4: #{tpu_custom_call.1} parent=1 // pred_region
      %27 = vsyncadd [#allocation3], 0
      %s28 = sshll.u32 %s0, 4
      %s29 = int_to_ptr.hbm [resolvable:$true] %s28
      %s30 = sshll.u32 [#allocation2], 4
      %s31 = int_to_ptr.vmem [resolvable:$true] %s30
      %36 = dma.hbm_to_vmem [thread:$0]  %s29, 256, %s31, [#allocation3], 128, 128, 8
    $region5: #{tpu_custom_call.1} parent=1 // pred_fallthru
      _
    // Predicated region
    $region6: #{tpu_custom_call.1} parent=1 // pred_check
      _
    $region7: #{tpu_custom_call.1} parent=1 // pred_check_branch
      %38 = sbr.rel (0) target = $region9
    $region8: #{tpu_custom_call.1} parent=1 // pred_region
      %40 = vsyncadd [#allocation6], 0
      %s41 = sshll.u32 %s1, 4
      %s42 = int_to_ptr.hbm [resolvable:$true] %s41
      %s43 = sshll.u32 [#allocation5], 4
      %s44 = int_to_ptr.vmem [resolvable:$true] %s43
      %49 = dma.hbm_to_vmem [thread:$0]  %s42, 256, %s44, [#allocation6], 128, 128, 8
    $region9: #{tpu_custom_call.1} parent=1 // pred_fallthru
      _
    // Predicated region
    $region10: #{tpu_custom_call.1} parent=1 // pred_check
      _
    $region11: #{tpu_custom_call.1} parent=1 // pred_check_branch
      %51 = sbr.rel (0) target = $region13
    $region12: #{tpu_custom_call.1} parent=1 // pred_region
      %53 = vsyncadd [#allocation6], 0
      %s54 = sshll.u32 %s2, 4
      %s55 = int_to_ptr.hbm [resolvable:$true] %s54
      %s56 = sshll.u32 [#allocation7], 4
      %s57 = int_to_ptr.vmem [resolvable:$true] %s56
      %62 = dma.hbm_to_vmem [thread:$0]  %s55, 1024, %s57, [#allocation6], 64, 64, 4
    $region13: #{tpu_custom_call.1} parent=1 // pred_fallthru
      _
    // Predicated region
    $region14: #{tpu_custom_call.1} parent=1 // pred_check
      _
    $region15: #{tpu_custom_call.1} parent=1 // pred_check_branch
      %64 = sbr.rel (0) target = $region17
    $region16: #{tpu_custom_call.1} parent=1 // pred_region
      _
    $region17: #{tpu_custom_call.1} parent=1 // pred_fallthru
      _
    // Predicated region
    $region18: #{tpu_custom_call.1} parent=1 // pred_check
      _
    $region19: #{tpu_custom_call.1} parent=1 // pred_check_branch
      %66 = sbr.rel (0) target = $region21
    $region20: #{tpu_custom_call.1} parent=1 // pred_region
      %68 = vsyncadd [#allocation9], 0
      %s69 = sshll.u32 %s4, 4
      %s70 = int_to_ptr.hbm [resolvable:$true] %s69
      %s71 = sshll.u32 [#allocation8], 4
      %s72 = int_to_ptr.vmem [resolvable:$true] %s71
      %77 = dma.hbm_to_vmem [thread:$0]  %s70, 1024, %s72, [#allocation9], 64, 64, 4
    $region21: #{tpu_custom_call.1} parent=1 // pred_fallthru
      _
    // Predicated region
    $region22: #{tpu_custom_call.1} parent=1 // pred_check
      _
    $region23: #{tpu_custom_call.1} parent=1 // pred_check_branch
      %79 = sbr.rel (0) target = $region25
    $region24: #{tpu_custom_call.1} parent=1 // pred_region
      _
    $region25: #{tpu_custom_call.1} parent=1 // pred_fallthru
      _
    // Predicated region
    $region26: #{tpu_custom_call.1} parent=1 // pred_check
      _
    $region27: #{tpu_custom_call.1} parent=1 // pred_check_branch
      %81 = sbr.rel (0) target = $region29
    $region28: #{tpu_custom_call.1} parent=1 // pred_region
      %83 = vsyncadd [#allocation9], 0
      %s84 = sshll.u32 %s6, 4
      %s85 = int_to_ptr.hbm [resolvable:$true] %s84
      %s86 = sshll.u32 [#allocation10], 4
      %s87 = int_to_ptr.vmem [resolvable:$true] %s86
      %92 = dma.hbm_to_vmem [thread:$0]  %s85, 1024, %s87, [#allocation9], 64, 64, 4
    $region29: #{tpu_custom_call.1} parent=1 // pred_fallthru
      _
    // Predicated region
    $region30: #{tpu_custom_call.1} parent=1 // pred_check
      _
    $region31: #{tpu_custom_call.1} parent=1 // pred_check_branch
      %94 = sbr.rel (0) target = $region33
    $region32: #{tpu_custom_call.1} parent=1 // pred_region
      %96 = vsyncadd [#allocation12], 0
      %s97 = sshll.u32 %s7, 4
      %s98 = int_to_ptr.hbm [resolvable:$true] %s97
      %s99 = sshll.u32 [#allocation11], 4
      %s100 = int_to_ptr.vmem [resolvable:$true] %s99
      %105 = dma.hbm_to_vmem [thread:$0]  %s98, 1024, %s100, [#allocation12], 64, 64, 4
    $region33: #{tpu_custom_call.1} parent=1 // pred_fallthru
      _
    // Predicated region
    $region34: #{tpu_custom_call.1} parent=1 // pred_check
      _
    $region35: #{tpu_custom_call.1} parent=1 // pred_check_branch
      %107 = sbr.rel (0) target = $region37
    $region36: #{tpu_custom_call.1} parent=1 // pred_region
      _
    $region37: #{tpu_custom_call.1} parent=1 // pred_fallthru
      _
    // Predicated region
    $region38: #{tpu_custom_call.1} parent=1 // pred_check
      _
    $region39: #{tpu_custom_call.1} parent=1 // pred_check_branch
      %109 = sbr.rel (0) target = $region41
    $region40: #{tpu_custom_call.1} parent=1 // pred_region
      %111 = vsyncadd [#allocation12], 0
      %s112 = sshll.u32 %s9, 4
      %s113 = int_to_ptr.hbm [resolvable:$true] %s112
      %s114 = sshll.u32 [#allocation13], 4
      %s115 = int_to_ptr.vmem [resolvable:$true] %s114
      %120 = dma.hbm_to_vmem [thread:$0]  %s113, 1024, %s115, [#allocation12], 64, 64, 4
    $region41: #{tpu_custom_call.1} parent=1 // pred_fallthru
      _
    // Predicated region
    $region42: #{tpu_custom_call.1} parent=1 // pred_check
      _
    $region43: #{tpu_custom_call.1} parent=1 // pred_check_branch
      %122 = sbr.rel (0) target = $region45
    $region44: #{tpu_custom_call.1} parent=1 // pred_region
      _
    $region45: #{tpu_custom_call.1} parent=1 // pred_fallthru
      _
    // Predicated region
    $region46: #{tpu_custom_call.1} parent=1 // pred_check
      _
    $region47: #{tpu_custom_call.1} parent=1 // pred_check_branch
      %124 = sbr.rel (0) target = $region49
    $region48: #{tpu_custom_call.1} parent=1 // pred_region
      %126 = vsyncadd [#allocation15], 0
      %s127 = sshll.u32 %s11, 4
      %s128 = int_to_ptr.hbm [resolvable:$true] %s127
      %s129 = sshll.u32 [#allocation14], 4
      %s130 = int_to_ptr.vmem [resolvable:$true] %s129
      %135 = dma.hbm_to_vmem [thread:$0]  %s128, 1024, %s130, [#allocation15], 64, 64, 4
    $region49: #{tpu_custom_call.1} parent=1 // pred_fallthru
      _
    // Predicated region
    $region50: #{tpu_custom_call.1} parent=1 // pred_check
      _
    $region51: #{tpu_custom_call.1} parent=1 // pred_check_branch
      %137 = sbr.rel (0) target = $region53
    $region52: #{tpu_custom_call.1} parent=1 // pred_region
      _
    $region53: #{tpu_custom_call.1} parent=1 // pred_fallthru
      _
    // Predicated region
    $region54: #{tpu_custom_call.1} parent=1 // pred_check
      _
    $region55: #{tpu_custom_call.1} parent=1 // pred_check_branch
      %139 = sbr.rel (0) target = $region57
    $region56: #{tpu_custom_call.1} parent=1 // pred_region
      %141 = dma.done [#allocation3], 256
    $region57: #{tpu_custom_call.1} parent=1 // pred_fallthru
      _
    // Predicated region
    $region58: #{tpu_custom_call.1} parent=1 // pred_check
      _
    $region59: #{tpu_custom_call.1} parent=1 // pred_check_branch
      %143 = sbr.rel (0) target = $region61
    $region60: #{tpu_custom_call.1} parent=1 // pred_region
      %145 = dma.done [#allocation6], 256
    $region61: #{tpu_custom_call.1} parent=1 // pred_fallthru
      _
    // Predicated region
    $region62: #{tpu_custom_call.1} parent=1 // pred_check
      _
    $region63: #{tpu_custom_call.1} parent=1 // pred_check_branch
      %147 = sbr.rel (0) target = $region65
    $region64: #{tpu_custom_call.1} parent=1 // pred_region
      %149 = dma.done [#allocation6], 1024
    $region65: #{tpu_custom_call.1} parent=1 // pred_fallthru
      _
    // Predicated region
    $region66: #{tpu_custom_call.1} parent=1 // pred_check
      _
    $region67: #{tpu_custom_call.1} parent=1 // pred_check_branch
      %151 = sbr.rel (0) target = $region69
    $region68: #{tpu_custom_call.1} parent=1 // pred_region
      %153 = dma.done [#allocation9], 1024
    $region69: #{tpu_custom_call.1} parent=1 // pred_fallthru
      _
    // Predicated region
    $region70: #{tpu_custom_call.1} parent=1 // pred_check
      _
    $region71: #{tpu_custom_call.1} parent=1 // pred_check_branch
      %155 = sbr.rel (0) target = $region73
    $region72: #{tpu_custom_call.1} parent=1 // pred_region
      %157 = dma.done [#allocation9], 1024
    $region73: #{tpu_custom_call.1} parent=1 // pred_fallthru
      _
    // Predicated region
    $region74: #{tpu_custom_call.1} parent=1 // pred_check
      _
    $region75: #{tpu_custom_call.1} parent=1 // pred_check_branch
      %159 = sbr.rel (0) target = $region77
    $region76: #{tpu_custom_call.1} parent=1 // pred_region
      %161 = dma.done [#allocation12], 1024
    $region77: #{tpu_custom_call.1} parent=1 // pred_fallthru
      _
    // Predicated region
    $region78: #{tpu_custom_call.1} parent=1 // pred_check
      _
    $region79: #{tpu_custom_call.1} parent=1 // pred_check_branch
      %163 = sbr.rel (0) target = $region81
    $region80: #{tpu_custom_call.1} parent=1 // pred_region
      %165 = dma.done [#allocation12], 1024
    $region81: #{tpu_custom_call.1} parent=1 // pred_fallthru
      _
    // Predicated region
    $region82: #{tpu_custom_call.1} parent=1 // pred_check
      _
    $region83: #{tpu_custom_call.1} parent=1 // pred_check_branch
      %167 = sbr.rel (0) target = $region85
    $region84: #{tpu_custom_call.1} parent=1 // pred_region
      %169 = dma.done [#allocation15], 1024
    $region85: #{tpu_custom_call.1} parent=1 // pred_fallthru
      _
    %v170 = vld [vmem:[#allocation2] sm:$0xff]
    %v171 = vld [vmem:[#allocation2 + $0x8] sm:$0xff]
    %v172 = vpack.c.bf16 %v171, %v170
    %v173 = vld [vmem:[#allocation7] sm:$0xf]
    %v174 = vld [vmem:[#allocation7 + $0x4] sm:$0xf]
    %v175 = vld [vmem:[#allocation7 + $0x8] sm:$0xf]
    %v176 = vld [vmem:[#allocation7 + $0xc] sm:$0xf]
    %v177 = vld [vmem:[#allocation7 + $0x10] sm:$0xf]
    %v178 = vld [vmem:[#allocation7 + $0x14] sm:$0xf]
    %v179 = vld [vmem:[#allocation7 + $0x18] sm:$0xf]
    %v180 = vld [vmem:[#allocation7 + $0x1c] sm:$0xf]
    %v181 = vld [vmem:[#allocation7 + $0x20] sm:$0xf]
    %v182 = vld [vmem:[#allocation7 + $0x24] sm:$0xf]
    %v183 = vld [vmem:[#allocation7 + $0x28] sm:$0xf]
    %v184 = vld [vmem:[#allocation7 + $0x2c] sm:$0xf]
    %v185 = vld [vmem:[#allocation7 + $0x30] sm:$0xf]
    %v186 = vld [vmem:[#allocation7 + $0x34] sm:$0xf]
    %v187 = vld [vmem:[#allocation7 + $0x38] sm:$0xf]
    %v188 = vld [vmem:[#allocation7 + $0x3c] sm:$0xf]
    %v189 = vld [vmem:[%s3] sm:$0x1]
    %v191 = vperm.slane %v189, 0
    %v209 = vunpack.c.l.b16 %v173
    %v210 = vunpack.c.l.b16 %v174
    %v211 = vunpack.c.l.b16 %v175
    %v212 = vunpack.c.l.b16 %v176
    %v213 = vunpack.c.l.b16 %v177
    %v214 = vunpack.c.l.b16 %v178
    %v215 = vunpack.c.l.b16 %v179
    %v216 = vunpack.c.l.b16 %v180
    %v217 = vunpack.c.l.b16 %v181
    %v218 = vunpack.c.l.b16 %v182
    %v219 = vunpack.c.l.b16 %v183
    %v220 = vunpack.c.l.b16 %v184
    %v221 = vunpack.c.l.b16 %v185
    %v222 = vunpack.c.l.b16 %v186
    %v223 = vunpack.c.l.b16 %v187
    %v224 = vunpack.c.l.b16 %v188
    %v225 = vpack.c.b16 %v210, %v209
    %v226 = vpack.c.b16 %v212, %v211
    %v227 = vpack.c.b16 %v214, %v213
    %v228 = vpack.c.b16 %v216, %v215
    %v229 = vpack.c.b16 %v218, %v217
    %v230 = vpack.c.b16 %v220, %v219
    %v231 = vpack.c.b16 %v222, %v221
    %v232 = vpack.c.b16 %v224, %v223
    %241 = vmatpush.bf16.msra.mxu0 %v232
    %242 = vmatpush.bf16.msra.mxu0 %v231
    %243 = vmatpush.bf16.msra.mxu0 %v230
    %244 = vmatpush.bf16.msra.mxu0 %v229
    %245 = vmatpush.bf16.msra.mxu0 %v228
    %246 = vmatpush.bf16.msra.mxu0 %v227
    %247 = vmatpush.bf16.msra.mxu0 %v226
    %248 = vmatpush.bf16.msra.mxu0 %v225
    %249 = vmatmul.bf16.gmra.mxu0 %v172
    %v250 = vpop.f32.mrf.mxu0
    %v251 = vadd.f32 %v191, %v250
    %v252 = vpop.f32.mrf.mxu0
    %v253 = vadd.f32 %v191, %v252
    %254 = vdwg.mxu0
    %v255 = vmax.f32 %v251, 0.0
    %v256 = vmax.f32 %v253, 0.0
    %v257 = vpack.c.bf16 %v256, %v255
    %v258 = vld [vmem:[#allocation8] sm:$0xf]
    %v259 = vld [vmem:[#allocation8 + $0x4] sm:$0xf]
    %v260 = vld [vmem:[#allocation8 + $0x8] sm:$0xf]
    %v261 = vld [vmem:[#allocation8 + $0xc] sm:$0xf]
    %v262 = vld [vmem:[#allocation8 + $0x10] sm:$0xf]
    %v263 = vld [vmem:[#allocation8 + $0x14] sm:$0xf]
    %v264 = vld [vmem:[#allocation8 + $0x18] sm:$0xf]
    %v265 = vld [vmem:[#allocation8 + $0x1c] sm:$0xf]
    %v266 = vld [vmem:[#allocation8 + $0x20] sm:$0xf]
    %v267 = vld [vmem:[#allocation8 + $0x24] sm:$0xf]
    %v268 = vld [vmem:[#allocation8 + $0x28] sm:$0xf]
    %v269 = vld [vmem:[#allocation8 + $0x2c] sm:$0xf]
    %v270 = vld [vmem:[#allocation8 + $0x30] sm:$0xf]
    %v271 = vld [vmem:[#allocation8 + $0x34] sm:$0xf]
    %v272 = vld [vmem:[#allocation8 + $0x38] sm:$0xf]
    %v273 = vld [vmem:[#allocation8 + $0x3c] sm:$0xf]
    %v274 = vld [vmem:[%s5] sm:$0x1]
    %v276 = vperm.slane %v274, 0
    %v294 = vunpack.c.l.b16 %v258
    %v295 = vunpack.c.l.b16 %v259
    %v296 = vunpack.c.l.b16 %v260
    %v297 = vunpack.c.l.b16 %v261
    %v298 = vunpack.c.l.b16 %v262
    %v299 = vunpack.c.l.b16 %v263
    %v300 = vunpack.c.l.b16 %v264
    %v301 = vunpack.c.l.b16 %v265
    %v302 = vunpack.c.l.b16 %v266
    %v303 = vunpack.c.l.b16 %v267
    %v304 = vunpack.c.l.b16 %v268
    %v305 = vunpack.c.l.b16 %v269
    %v306 = vunpack.c.l.b16 %v270
    %v307 = vunpack.c.l.b16 %v271
    %v308 = vunpack.c.l.b16 %v272
    %v309 = vunpack.c.l.b16 %v273
    %v310 = vpack.c.b16 %v295, %v294
    %v311 = vpack.c.b16 %v297, %v296
    %v312 = vpack.c.b16 %v299, %v298
    %v313 = vpack.c.b16 %v301, %v300
    %v314 = vpack.c.b16 %v303, %v302
    %v315 = vpack.c.b16 %v305, %v304
    %v316 = vpack.c.b16 %v307, %v306
    %v317 = vpack.c.b16 %v309, %v308
    %326 = vmatpush.bf16.msra.mxu0 %v317
    %327 = vmatpush.bf16.msra.mxu0 %v316
    %328 = vmatpush.bf16.msra.mxu0 %v315
    %329 = vmatpush.bf16.msra.mxu0 %v314
    %330 = vmatpush.bf16.msra.mxu0 %v313
    %331 = vmatpush.bf16.msra.mxu0 %v312
    %332 = vmatpush.bf16.msra.mxu0 %v311
    %333 = vmatpush.bf16.msra.mxu0 %v310
    %334 = vmatmul.bf16.gmra.mxu0 %v257
    %v335 = vpop.f32.mrf.mxu0
    %v336 = vadd.f32 %v276, %v335
    %v337 = vpop.f32.mrf.mxu0
    %v338 = vadd.f32 %v276, %v337
    %339 = vdwg.mxu0
    %v340 = vmax.f32 %v336, 0.0
    %v341 = vmax.f32 %v338, 0.0
    %v342 = vpack.c.bf16 %v341, %v340
    %v343 = vld [vmem:[#allocation5] sm:$0xff]
    %v344 = vld [vmem:[#allocation5 + $0x8] sm:$0xff]
    %v345 = vpack.c.bf16 %v344, %v343
    %v346 = vld [vmem:[#allocation11] sm:$0xf]
    %v347 = vld [vmem:[#allocation11 + $0x4] sm:$0xf]
    %v348 = vld [vmem:[#allocation11 + $0x8] sm:$0xf]
    %v349 = vld [vmem:[#allocation11 + $0xc] sm:$0xf]
    %v350 = vld [vmem:[#allocation11 + $0x10] sm:$0xf]
    %v351 = vld [vmem:[#allocation11 + $0x14] sm:$0xf]
    %v352 = vld [vmem:[#allocation11 + $0x18] sm:$0xf]
    %v353 = vld [vmem:[#allocation11 + $0x1c] sm:$0xf]
    %v354 = vld [vmem:[#allocation11 + $0x20] sm:$0xf]
    %v355 = vld [vmem:[#allocation11 + $0x24] sm:$0xf]
    %v356 = vld [vmem:[#allocation11 + $0x28] sm:$0xf]
    %v357 = vld [vmem:[#allocation11 + $0x2c] sm:$0xf]
    %v358 = vld [vmem:[#allocation11 + $0x30] sm:$0xf]
    %v359 = vld [vmem:[#allocation11 + $0x34] sm:$0xf]
    %v360 = vld [vmem:[#allocation11 + $0x38] sm:$0xf]
    %v361 = vld [vmem:[#allocation11 + $0x3c] sm:$0xf]
    %v362 = vld [vmem:[%s8] sm:$0x1]
    %v364 = vperm.slane %v362, 0
    %v382 = vunpack.c.l.b16 %v346
    %v383 = vunpack.c.l.b16 %v347
    %v384 = vunpack.c.l.b16 %v348
    %v385 = vunpack.c.l.b16 %v349
    %v386 = vunpack.c.l.b16 %v350
    %v387 = vunpack.c.l.b16 %v351
    %v388 = vunpack.c.l.b16 %v352
    %v389 = vunpack.c.l.b16 %v353
    %v390 = vunpack.c.l.b16 %v354
    %v391 = vunpack.c.l.b16 %v355
    %v392 = vunpack.c.l.b16 %v356
    %v393 = vunpack.c.l.b16 %v357
    %v394 = vunpack.c.l.b16 %v358
    %v395 = vunpack.c.l.b16 %v359
    %v396 = vunpack.c.l.b16 %v360
    %v397 = vunpack.c.l.b16 %v361
    %v398 = vpack.c.b16 %v383, %v382
    %v399 = vpack.c.b16 %v385, %v384
    %v400 = vpack.c.b16 %v387, %v386
    %v401 = vpack.c.b16 %v389, %v388
    %v402 = vpack.c.b16 %v391, %v390
    %v403 = vpack.c.b16 %v393, %v392
    %v404 = vpack.c.b16 %v395, %v394
    %v405 = vpack.c.b16 %v397, %v396
    %414 = vmatpush.bf16.msra.mxu0 %v405
    %415 = vmatpush.bf16.msra.mxu0 %v404
    %416 = vmatpush.bf16.msra.mxu0 %v403
    %417 = vmatpush.bf16.msra.mxu0 %v402
    %418 = vmatpush.bf16.msra.mxu0 %v401
    %419 = vmatpush.bf16.msra.mxu0 %v400
    %420 = vmatpush.bf16.msra.mxu0 %v399
    %421 = vmatpush.bf16.msra.mxu0 %v398
    %422 = vmatmul.bf16.gmra.mxu0 %v345
    %v423 = vpop.f32.mrf.mxu0
    %v424 = vadd.f32 %v364, %v423
    %v425 = vpop.f32.mrf.mxu0
    %v426 = vadd.f32 %v364, %v425
    %427 = vdwg.mxu0
    %v428 = vmax.f32 %v424, 0.0
    %v429 = vmax.f32 %v426, 0.0
    %v430 = vpack.c.bf16 %v429, %v428
    %v431 = vld [vmem:[#allocation13] sm:$0xf]
    %v432 = vld [vmem:[#allocation13 + $0x4] sm:$0xf]
    %v433 = vld [vmem:[#allocation13 + $0x8] sm:$0xf]
    %v434 = vld [vmem:[#allocation13 + $0xc] sm:$0xf]
    %v435 = vld [vmem:[#allocation13 + $0x10] sm:$0xf]
    %v436 = vld [vmem:[#allocation13 + $0x14] sm:$0xf]
    %v437 = vld [vmem:[#allocation13 + $0x18] sm:$0xf]
    %v438 = vld [vmem:[#allocation13 + $0x1c] sm:$0xf]
    %v439 = vld [vmem:[#allocation13 + $0x20] sm:$0xf]
    %v440 = vld [vmem:[#allocation13 + $0x24] sm:$0xf]
    %v441 = vld [vmem:[#allocation13 + $0x28] sm:$0xf]
    %v442 = vld [vmem:[#allocation13 + $0x2c] sm:$0xf]
    %v443 = vld [vmem:[#allocation13 + $0x30] sm:$0xf]
    %v444 = vld [vmem:[#allocation13 + $0x34] sm:$0xf]
    %v445 = vld [vmem:[#allocation13 + $0x38] sm:$0xf]
    %v446 = vld [vmem:[#allocation13 + $0x3c] sm:$0xf]
    %v447 = vld [vmem:[%s10] sm:$0x1]
    %v449 = vperm.slane %v447, 0
    %v467 = vunpack.c.l.b16 %v431
    %v468 = vunpack.c.l.b16 %v432
    %v469 = vunpack.c.l.b16 %v433
    %v470 = vunpack.c.l.b16 %v434
    %v471 = vunpack.c.l.b16 %v435
    %v472 = vunpack.c.l.b16 %v436
    %v473 = vunpack.c.l.b16 %v437
    %v474 = vunpack.c.l.b16 %v438
    %v475 = vunpack.c.l.b16 %v439
    %v476 = vunpack.c.l.b16 %v440
    %v477 = vunpack.c.l.b16 %v441
    %v478 = vunpack.c.l.b16 %v442
    %v479 = vunpack.c.l.b16 %v443
    %v480 = vunpack.c.l.b16 %v444
    %v481 = vunpack.c.l.b16 %v445
    %v482 = vunpack.c.l.b16 %v446
    %v483 = vpack.c.b16 %v468, %v467
    %v484 = vpack.c.b16 %v470, %v469
    %v485 = vpack.c.b16 %v472, %v471
    %v486 = vpack.c.b16 %v474, %v473
    %v487 = vpack.c.b16 %v476, %v475
    %v488 = vpack.c.b16 %v478, %v477
    %v489 = vpack.c.b16 %v480, %v479
    %v490 = vpack.c.b16 %v482, %v481
    %499 = vmatpush.bf16.msra.mxu0 %v490
    %500 = vmatpush.bf16.msra.mxu0 %v489
    %501 = vmatpush.bf16.msra.mxu0 %v488
    %502 = vmatpush.bf16.msra.mxu0 %v487
    %503 = vmatpush.bf16.msra.mxu0 %v486
    %504 = vmatpush.bf16.msra.mxu0 %v485
    %505 = vmatpush.bf16.msra.mxu0 %v484
    %506 = vmatpush.bf16.msra.mxu0 %v483
    %507 = vmatmul.bf16.gmra.mxu0 %v430
    %v508 = vpop.f32.mrf.mxu0
    %v509 = vadd.f32 %v449, %v508
    %v510 = vpop.f32.mrf.mxu0
    %v511 = vadd.f32 %v449, %v510
    %512 = vdwg.mxu0
    %v513 = vmax.f32 %v509, 0.0
    %v514 = vmax.f32 %v511, 0.0
    %v515 = vpack.c.bf16 %v514, %v513
    %v516 = vld [vmem:[#allocation10] sm:$0xf]
    %v517 = vld [vmem:[#allocation10 + $0x4] sm:$0xf]
    %v518 = vld [vmem:[#allocation10 + $0x8] sm:$0xf]
    %v519 = vld [vmem:[#allocation10 + $0xc] sm:$0xf]
    %v520 = vld [vmem:[#allocation10 + $0x10] sm:$0xf]
    %v521 = vld [vmem:[#allocation10 + $0x14] sm:$0xf]
    %v522 = vld [vmem:[#allocation10 + $0x18] sm:$0xf]
    %v523 = vld [vmem:[#allocation10 + $0x1c] sm:$0xf]
    %v524 = vld [vmem:[#allocation10 + $0x20] sm:$0xf]
    %v525 = vld [vmem:[#allocation10 + $0x24] sm:$0xf]
    %v526 = vld [vmem:[#allocation10 + $0x28] sm:$0xf]
    %v527 = vld [vmem:[#allocation10 + $0x2c] sm:$0xf]
    %v528 = vld [vmem:[#allocation10 + $0x30] sm:$0xf]
    %v529 = vld [vmem:[#allocation10 + $0x34] sm:$0xf]
    %v530 = vld [vmem:[#allocation10 + $0x38] sm:$0xf]
    %v531 = vld [vmem:[#allocation10 + $0x3c] sm:$0xf]
    %v532 = vld [vmem:[#allocation14] sm:$0xf]
    %v533 = vld [vmem:[#allocation14 + $0x4] sm:$0xf]
    %v534 = vld [vmem:[#allocation14 + $0x8] sm:$0xf]
    %v535 = vld [vmem:[#allocation14 + $0xc] sm:$0xf]
    %v536 = vld [vmem:[#allocation14 + $0x10] sm:$0xf]
    %v537 = vld [vmem:[#allocation14 + $0x14] sm:$0xf]
    %v538 = vld [vmem:[#allocation14 + $0x18] sm:$0xf]
    %v539 = vld [vmem:[#allocation14 + $0x1c] sm:$0xf]
    %v540 = vld [vmem:[#allocation14 + $0x20] sm:$0xf]
    %v541 = vld [vmem:[#allocation14 + $0x24] sm:$0xf]
    %v542 = vld [vmem:[#allocation14 + $0x28] sm:$0xf]
    %v543 = vld [vmem:[#allocation14 + $0x2c] sm:$0xf]
    %v544 = vld [vmem:[#allocation14 + $0x30] sm:$0xf]
    %v545 = vld [vmem:[#allocation14 + $0x34] sm:$0xf]
    %v546 = vld [vmem:[#allocation14 + $0x38] sm:$0xf]
    %v547 = vld [vmem:[#allocation14 + $0x3c] sm:$0xf]
    %v564 = vunpack.c.l.b16 %v532
    %v565 = vunpack.c.l.b16 %v533
    %v566 = vunpack.c.l.b16 %v534
    %v567 = vunpack.c.l.b16 %v535
    %v568 = vunpack.c.l.b16 %v536
    %v569 = vunpack.c.l.b16 %v537
    %v570 = vunpack.c.l.b16 %v538
    %v571 = vunpack.c.l.b16 %v539
    %v572 = vunpack.c.l.b16 %v540
    %v573 = vunpack.c.l.b16 %v541
    %v574 = vunpack.c.l.b16 %v542
    %v575 = vunpack.c.l.b16 %v543
    %v576 = vunpack.c.l.b16 %v544
    %v577 = vunpack.c.l.b16 %v545
    %v578 = vunpack.c.l.b16 %v546
    %v579 = vunpack.c.l.b16 %v547
    %v580 = vpack.c.b16 %v565, %v564
    %v581 = vpack.c.b16 %v567, %v566
    %v582 = vpack.c.b16 %v569, %v568
    %v583 = vpack.c.b16 %v571, %v570
    %v584 = vpack.c.b16 %v573, %v572
    %v585 = vpack.c.b16 %v575, %v574
    %v586 = vpack.c.b16 %v577, %v576
    %v587 = vpack.c.b16 %v579, %v578
    %596 = vmatpush.bf16.msra.mxu0 %v587
    %597 = vmatpush.bf16.msra.mxu0 %v586
    %598 = vmatpush.bf16.msra.mxu0 %v585
    %599 = vmatpush.bf16.msra.mxu0 %v584
    %600 = vmatpush.bf16.msra.mxu0 %v583
    %601 = vmatpush.bf16.msra.mxu0 %v582
    %602 = vmatpush.bf16.msra.mxu0 %v581
    %603 = vmatpush.bf16.msra.mxu0 %v580
    %604 = vmatmul.bf16.gmra.mxu0 %v515
    %v605 = vpop.f32.mrf.mxu0
    %v606 = vadd.f32 0.0, %v605
    %v607 = vpop.f32.mrf.mxu0
    %v608 = vadd.f32 0.0, %v607
    %609 = vdwg.mxu0
    %v626 = vunpack.c.l.b16 %v516
    %v627 = vunpack.c.l.b16 %v517
    %v628 = vunpack.c.l.b16 %v518
    %v629 = vunpack.c.l.b16 %v519
    %v630 = vunpack.c.l.b16 %v520
    %v631 = vunpack.c.l.b16 %v521
    %v632 = vunpack.c.l.b16 %v522
    %v633 = vunpack.c.l.b16 %v523
    %v634 = vunpack.c.l.b16 %v524
    %v635 = vunpack.c.l.b16 %v525
    %v636 = vunpack.c.l.b16 %v526
    %v637 = vunpack.c.l.b16 %v527
    %v638 = vunpack.c.l.b16 %v528
    %v639 = vunpack.c.l.b16 %v529
    %v640 = vunpack.c.l.b16 %v530
    %v641 = vunpack.c.l.b16 %v531
    %v642 = vpack.c.b16 %v627, %v626
    %v643 = vpack.c.b16 %v629, %v628
    %v644 = vpack.c.b16 %v631, %v630
    %v645 = vpack.c.b16 %v633, %v632
    %v646 = vpack.c.b16 %v635, %v634
    %v647 = vpack.c.b16 %v637, %v636
    %v648 = vpack.c.b16 %v639, %v638
    %v649 = vpack.c.b16 %v641, %v640
    %658 = vmatpush.bf16.msra.mxu0 %v649
    %659 = vmatpush.bf16.msra.mxu0 %v648
    %660 = vmatpush.bf16.msra.mxu0 %v647
    %661 = vmatpush.bf16.msra.mxu0 %v646
    %662 = vmatpush.bf16.msra.mxu0 %v645
    %663 = vmatpush.bf16.msra.mxu0 %v644
    %664 = vmatpush.bf16.msra.mxu0 %v643
    %665 = vmatpush.bf16.msra.mxu0 %v642
    %666 = vmatmul.bf16.gmra.mxu0 %v342
    %v667 = vpop.f32.mrf.mxu0
    %v668 = vadd.f32 %v606, %v667
    %v669 = vpop.f32.mrf.mxu0
    %v670 = vadd.f32 %v608, %v669
    %671 = vdwg.mxu0
    %v672 = vld [vmem:[%s12] sm:$0x1]
    %v674 = vperm.slane %v672, 0
    %v676 = vadd.f32 %v668, %v674
    %v677 = vadd.f32 %v670, %v674
    %678 = vst [vmem:[#allocation16] sm:$0xff] %v676
    %679 = vst [vmem:[#allocation16 + $0x8] sm:$0xff] %v677
    // Predicated region
    $region86: #{tpu_custom_call.1} parent=1 // pred_check
      _
    $region87: #{tpu_custom_call.1} parent=1 // pred_check_branch
      %681 = sbr.rel (0) target = $region89
    $region88: #{tpu_custom_call.1} parent=1 // pred_region
      %683 = vsyncadd [#allocation4], 0
      %s684 = sshll.u32 [#allocation16], 4
      %s685 = int_to_ptr.vmem [resolvable:$true] %s684
      %s686 = sshll.u32 %s13, 4
      %s687 = int_to_ptr.hbm [resolvable:$true] %s686
      %692 = dma.vmem_to_hbm [thread:$0]  %s685, 256, %s687, [#allocation4], 128, 128, 8
    $region89: #{tpu_custom_call.1} parent=1 // pred_fallthru
      _
    // Predicated region
    $region90: #{tpu_custom_call.1} parent=1 // pred_check
      _
    $region91: #{tpu_custom_call.1} parent=1 // pred_check_branch
      %694 = sbr.rel (0) target = $region93
    $region92: #{tpu_custom_call.1} parent=1 // pred_region
      %696 = dma.done [#allocation4], 256
    $region93: #{tpu_custom_call.1} parent=1 // pred_fallthru
      _
    %697 = vsyncpa [#allocation3], 1
    %698 = vsyncpa [#allocation6], 1
    %699 = vsyncpa [#allocation9], 1
    %700 = vsyncpa [#allocation12], 1
    %701 = vsyncpa [#allocation15], 1
    %702 = vsyncpa [#allocation4], 1

// kernel: tpu_custom_call.1
$region0: #{tpu_custom_call.1}
  #allocation0 [shape = 'u32[]', space=smem, size = 0x4, offset = 0x4, fixed_abs, tag = 'smem constant byte address 0x4 - core index']
  #allocation1 [shape = 'u32[72,128]{1,0:T(1,128)}', space=vmem, size = 0x9000, scoped, tag = 'internal scratch']
  %s0 = inlined_call_operand.hbm [shape: f32[16,128], index: 0, kind: input, shape index: {}]
  %s1 = inlined_call_operand.hbm [shape: f32[16,128], index: 1, kind: input, shape index: {}]
  %s2 = inlined_call_operand.hbm [shape: bf16[128,128], index: 2, kind: input, shape index: {}]
  %s3 = inlined_call_operand.vmem [shape: f32[1,128], index: 3, kind: input, shape index: {}]
  %s4 = inlined_call_operand.hbm [shape: bf16[128,128], index: 4, kind: input, shape index: {}]
  %s5 = inlined_call_operand.vmem [shape: f32[1,128], index: 5, kind: input, shape index: {}]
  %s6 = inlined_call_operand.hbm [shape: bf16[128,128], index: 6, kind: input, shape index: {}]
  %s7 = inlined_call_operand.hbm [shape: bf16[128,128], index: 7, kind: input, shape index: {}]
  %s8 = inlined_call_operand.vmem [shape: f32[1,128], index: 8, kind: input, shape index: {}]
  %s9 = inlined_call_operand.hbm [shape: bf16[128,128], index: 9, kind: input, shape index: {}]
  %s10 = inlined_call_operand.vmem [shape: f32[1,128], index: 10, kind: input, shape index: {}]
  %s11 = inlined_call_operand.hbm [shape: bf16[128,128], index: 11, kind: input, shape index: {}]
  %s12 = inlined_call_operand.vmem [shape: f32[1,128], index: 12, kind: input, shape index: {}]
  %s13 = inlined_call_operand.hbm [shape: f32[16,128], index: 13, kind: output, shape index: {}]
  %s14 = sld [smem:[#allocation0]]
  $region94: #{tpu_custom_call.1} parent=0
    _
  %s16 = ssub.s32 1, %s14
  %s17 = scalar_select 0, %s16, %s14
  $region1: #{tpu_custom_call.1} parent=0
    #allocation2 [shape = 'u8[8192]{0}', space=vmem, size = 0x2000, scoped, tag = 'input window, operand 0, single buffered']
    #allocation3 [shape = 's32[1]{0}', space=sflag, size = 0x4, scoped, tag = 'scoped memory for tpu_custom_call.1']
    #allocation4 [shape = 's32[1]{0}', space=sflag, size = 0x4, scoped, tag = 'scoped memory for tpu_custom_call.1']
    #allocation5 [shape = 'u8[8192]{0}', space=vmem, size = 0x2000, scoped, tag = 'input window, operand 1, single buffered']
    #allocation6 [shape = 's32[1]{0}', space=sflag, size = 0x4, scoped, tag = 'scoped memory for tpu_custom_call.1']
    #allocation7 [shape = 'u8[32768]{0}', space=vmem, size = 0x8000, scoped, tag = 'input window, operand 2, single buffered']
    #allocation8 [shape = 'u8[32768]{0}', space=vmem, size = 0x8000, scoped, tag = 'input window, operand 4, single buffered']
    #allocation9 [shape = 's32[1]{0}', space=sflag, size = 0x4, scoped, tag = 'scoped memory for tpu_custom_call.1']
    #allocation10 [shape = 'u8[32768]{0}', space=vmem, size = 0x8000, scoped, tag = 'input window, operand 6, single buffered']
    #allocation11 [shape = 'u8[32768]{0}', space=vmem, size = 0x8000, scoped, tag = 'input window, operand 7, single buffered']
    #allocation12 [shape = 's32[1]{0}', space=sflag, size = 0x4, scoped, tag = 'scoped memory for tpu_custom_call.1']
    #allocation13 [shape = 'u8[32768]{0}', space=vmem, size = 0x8000, scoped, tag = 'input window, operand 9, single buffered']
    #allocation14 [shape = 'u8[32768]{0}', space=vmem, size = 0x8000, scoped, tag = 'input window, operand 11, single buffered']
    #allocation15 [shape = 's32[1]{0}', space=sflag, size = 0x4, scoped, tag = 'scoped memory for tpu_custom_call.1']
    #allocation16 [shape = 'u8[8192]{0}', space=vmem, size = 0x2000, scoped, tag = 'output window, operand 0, single buffered']
    %18 = vsyncpa [#allocation3], 0
    %19 = vsyncpa [#allocation6], 0
    %20 = vsyncpa [#allocation9], 0
    %21 = vsyncpa [#allocation12], 0
    %22 = vsyncpa [#allocation15], 0
    %23 = vsyncpa [#allocation4], 0
    // Predicated region
    $region2: #{tpu_custom_call.1} parent=1 // pred_check
      _
    $region3: #{tpu_custom_call.1} parent=1 // pred_check_branch
      %25 = sbr.rel (0) target = $region5
    $region4: #{tpu_custom_call.1} parent=1 // pred_region
      %27 = vsyncadd [#allocation3], 0
      %s28 = sshll.u32 %s0, 4
      %s29 = int_to_ptr.hbm [resolvable:$true] %s28
      %s30 = sshll.u32 [#allocation2], 4
      %s31 = int_to_ptr.vmem [resolvable:$true] %s30
      %36 = dma.hbm_to_vmem [thread:$0]  %s29, 256, %s31, [#allocation3], 128, 128, 8
    $region5: #{tpu_custom_call.1} parent=1 // pred_fallthru
      _
    // Predicated region
    $region6: #{tpu_custom_call.1} parent=1 // pred_check
      _
    $region7: #{tpu_custom_call.1} parent=1 // pred_check_branch
      %38 = sbr.rel (0) target = $region9
    $region8: #{tpu_custom_call.1} parent=1 // pred_region
      %40 = vsyncadd [#allocation6], 0
      %s41 = sshll.u32 %s1, 4
      %s42 = int_to_ptr.hbm [resolvable:$true] %s41
      %s43 = sshll.u32 [#allocation5], 4
      %s44 = int_to_ptr.vmem [resolvable:$true] %s43
      %49 = dma.hbm_to_vmem [thread:$0]  %s42, 256, %s44, [#allocation6], 128, 128, 8
    $region9: #{tpu_custom_call.1} parent=1 // pred_fallthru
      _
    // Predicated region
    $region10: #{tpu_custom_call.1} parent=1 // pred_check
      _
    $region11: #{tpu_custom_call.1} parent=1 // pred_check_branch
      %51 = sbr.rel (0) target = $region13
    $region12: #{tpu_custom_call.1} parent=1 // pred_region
      %53 = vsyncadd [#allocation6], 0
      %s54 = sshll.u32 %s2, 4
      %s55 = int_to_ptr.hbm [resolvable:$true] %s54
      %s56 = sshll.u32 [#allocation7], 4
      %s57 = int_to_ptr.vmem [resolvable:$true] %s56
      %62 = dma.hbm_to_vmem [thread:$0]  %s55, 1024, %s57, [#allocation6], 64, 64, 4
    $region13: #{tpu_custom_call.1} parent=1 // pred_fallthru
      _
    // Predicated region
    $region14: #{tpu_custom_call.1} parent=1 // pred_check
      _
    $region15: #{tpu_custom_call.1} parent=1 // pred_check_branch
      %64 = sbr.rel (0) target = $region17
    $region16: #{tpu_custom_call.1} parent=1 // pred_region
      _
    $region17: #{tpu_custom_call.1} parent=1 // pred_fallthru
      _
    // Predicated region
    $region18: #{tpu_custom_call.1} parent=1 // pred_check
      _
    $region19: #{tpu_custom_call.1} parent=1 // pred_check_branch
      %66 = sbr.rel (0) target = $region21
    $region20: #{tpu_custom_call.1} parent=1 // pred_region
      %68 = vsyncadd [#allocation9], 0
      %s69 = sshll.u32 %s4, 4
      %s70 = int_to_ptr.hbm [resolvable:$true] %s69
      %s71 = sshll.u32 [#allocation8], 4
      %s72 = int_to_ptr.vmem [resolvable:$true] %s71
      %77 = dma.hbm_to_vmem [thread:$0]  %s70, 1024, %s72, [#allocation9], 64, 64, 4
    $region21: #{tpu_custom_call.1} parent=1 // pred_fallthru
      _
    // Predicated region
    $region22: #{tpu_custom_call.1} parent=1 // pred_check
      _
    $region23: #{tpu_custom_call.1} parent=1 // pred_check_branch
      %79 = sbr.rel (0) target = $region25
    $region24: #{tpu_custom_call.1} parent=1 // pred_region
      _
    $region25: #{tpu_custom_call.1} parent=1 // pred_fallthru
      _
    // Predicated region
    $region26: #{tpu_custom_call.1} parent=1 // pred_check
      _
    $region27: #{tpu_custom_call.1} parent=1 // pred_check_branch
      %81 = sbr.rel (0) target = $region29
    $region28: #{tpu_custom_call.1} parent=1 // pred_region
      %83 = vsyncadd [#allocation9], 0
      %s84 = sshll.u32 %s6, 4
      %s85 = int_to_ptr.hbm [resolvable:$true] %s84
      %s86 = sshll.u32 [#allocation10], 4
      %s87 = int_to_ptr.vmem [resolvable:$true] %s86
      %92 = dma.hbm_to_vmem [thread:$0]  %s85, 1024, %s87, [#allocation9], 64, 64, 4
    $region29: #{tpu_custom_call.1} parent=1 // pred_fallthru
      _
    // Predicated region
    $region30: #{tpu_custom_call.1} parent=1 // pred_check
      _
    $region31: #{tpu_custom_call.1} parent=1 // pred_check_branch
      %94 = sbr.rel (0) target = $region33
    $region32: #{tpu_custom_call.1} parent=1 // pred_region
      %96 = vsyncadd [#allocation12], 0
      %s97 = sshll.u32 %s7, 4
      %s98 = int_to_ptr.hbm [resolvable:$true] %s97
      %s99 = sshll.u32 [#allocation11], 4
      %s100 = int_to_ptr.vmem [resolvable:$true] %s99
      %105 = dma.hbm_to_vmem [thread:$0]  %s98, 1024, %s100, [#allocation12], 64, 64, 4
    $region33: #{tpu_custom_call.1} parent=1 // pred_fallthru
      _
    // Predicated region
    $region34: #{tpu_custom_call.1} parent=1 // pred_check
      _
    $region35: #{tpu_custom_call.1} parent=1 // pred_check_branch
      %107 = sbr.rel (0) target = $region37
    $region36: #{tpu_custom_call.1} parent=1 // pred_region
      _
    $region37: #{tpu_custom_call.1} parent=1 // pred_fallthru
      _
    // Predicated region
    $region38: #{tpu_custom_call.1} parent=1 // pred_check
      _
    $region39: #{tpu_custom_call.1} parent=1 // pred_check_branch
      %109 = sbr.rel (0) target = $region41
    $region40: #{tpu_custom_call.1} parent=1 // pred_region
      %111 = vsyncadd [#allocation12], 0
      %s112 = sshll.u32 %s9, 4
      %s113 = int_to_ptr.hbm [resolvable:$true] %s112
      %s114 = sshll.u32 [#allocation13], 4
      %s115 = int_to_ptr.vmem [resolvable:$true] %s114
      %120 = dma.hbm_to_vmem [thread:$0]  %s113, 1024, %s115, [#allocation12], 64, 64, 4
    $region41: #{tpu_custom_call.1} parent=1 // pred_fallthru
      _
    // Predicated region
    $region42: #{tpu_custom_call.1} parent=1 // pred_check
      _
    $region43: #{tpu_custom_call.1} parent=1 // pred_check_branch
      %122 = sbr.rel (0) target = $region45
    $region44: #{tpu_custom_call.1} parent=1 // pred_region
      _
    $region45: #{tpu_custom_call.1} parent=1 // pred_fallthru
      _
    // Predicated region
    $region46: #{tpu_custom_call.1} parent=1 // pred_check
      _
    $region47: #{tpu_custom_call.1} parent=1 // pred_check_branch
      %124 = sbr.rel (0) target = $region49
    $region48: #{tpu_custom_call.1} parent=1 // pred_region
      %126 = vsyncadd [#allocation15], 0
      %s127 = sshll.u32 %s11, 4
      %s128 = int_to_ptr.hbm [resolvable:$true] %s127
      %s129 = sshll.u32 [#allocation14], 4
      %s130 = int_to_ptr.vmem [resolvable:$true] %s129
      %135 = dma.hbm_to_vmem [thread:$0]  %s128, 1024, %s130, [#allocation15], 64, 64, 4
    $region49: #{tpu_custom_call.1} parent=1 // pred_fallthru
      _
    // Predicated region
    $region50: #{tpu_custom_call.1} parent=1 // pred_check
      _
    $region51: #{tpu_custom_call.1} parent=1 // pred_check_branch
      %137 = sbr.rel (0) target = $region53
    $region52: #{tpu_custom_call.1} parent=1 // pred_region
      _
    $region53: #{tpu_custom_call.1} parent=1 // pred_fallthru
      _
    // Predicated region
    $region54: #{tpu_custom_call.1} parent=1 // pred_check
      _
    $region55: #{tpu_custom_call.1} parent=1 // pred_check_branch
      %139 = sbr.rel (0) target = $region57
    $region56: #{tpu_custom_call.1} parent=1 // pred_region
      %141 = dma.done [#allocation3], 256
    $region57: #{tpu_custom_call.1} parent=1 // pred_fallthru
      _
    // Predicated region
    $region58: #{tpu_custom_call.1} parent=1 // pred_check
      _
    $region59: #{tpu_custom_call.1} parent=1 // pred_check_branch
      %143 = sbr.rel (0) target = $region61
    $region60: #{tpu_custom_call.1} parent=1 // pred_region
      %145 = dma.done [#allocation6], 256
    $region61: #{tpu_custom_call.1} parent=1 // pred_fallthru
      _
    // Predicated region
    $region62: #{tpu_custom_call.1} parent=1 // pred_check
      _
    $region63: #{tpu_custom_call.1} parent=1 // pred_check_branch
      %147 = sbr.rel (0) target = $region65
    $region64: #{tpu_custom_call.1} parent=1 // pred_region
      %149 = dma.done [#allocation6], 1024
    $region65: #{tpu_custom_call.1} parent=1 // pred_fallthru
      _
    // Predicated region
    $region66: #{tpu_custom_call.1} parent=1 // pred_check
      _
    $region67: #{tpu_custom_call.1} parent=1 // pred_check_branch
      %151 = sbr.rel (0) target = $region69
    $region68: #{tpu_custom_call.1} parent=1 // pred_region
      %153 = dma.done [#allocation9], 1024
    $region69: #{tpu_custom_call.1} parent=1 // pred_fallthru
      _
    // Predicated region
    $region70: #{tpu_custom_call.1} parent=1 // pred_check
      _
    $region71: #{tpu_custom_call.1} parent=1 // pred_check_branch
      %155 = sbr.rel (0) target = $region73
    $region72: #{tpu_custom_call.1} parent=1 // pred_region
      %157 = dma.done [#allocation9], 1024
    $region73: #{tpu_custom_call.1} parent=1 // pred_fallthru
      _
    // Predicated region
    $region74: #{tpu_custom_call.1} parent=1 // pred_check
      _
    $region75: #{tpu_custom_call.1} parent=1 // pred_check_branch
      %159 = sbr.rel (0) target = $region77
    $region76: #{tpu_custom_call.1} parent=1 // pred_region
      %161 = dma.done [#allocation12], 1024
    $region77: #{tpu_custom_call.1} parent=1 // pred_fallthru
      _
    // Predicated region
    $region78: #{tpu_custom_call.1} parent=1 // pred_check
      _
    $region79: #{tpu_custom_call.1} parent=1 // pred_check_branch
      %163 = sbr.rel (0) target = $region81
    $region80: #{tpu_custom_call.1} parent=1 // pred_region
      %165 = dma.done [#allocation12], 1024
    $region81: #{tpu_custom_call.1} parent=1 // pred_fallthru
      _
    // Predicated region
    $region82: #{tpu_custom_call.1} parent=1 // pred_check
      _
    $region83: #{tpu_custom_call.1} parent=1 // pred_check_branch
      %167 = sbr.rel (0) target = $region85
    $region84: #{tpu_custom_call.1} parent=1 // pred_region
      %169 = dma.done [#allocation15], 1024
    $region85: #{tpu_custom_call.1} parent=1 // pred_fallthru
      _
    %v170 = vld [vmem:[#allocation2] sm:$0xff]
    %v171 = vld [vmem:[#allocation2 + $0x8] sm:$0xff]
    %v172 = vpack.c.bf16 %v171, %v170
    %v173 = vld [vmem:[#allocation7] sm:$0xf]
    %v174 = vld [vmem:[#allocation7 + $0x4] sm:$0xf]
    %v175 = vld [vmem:[#allocation7 + $0x8] sm:$0xf]
    %v176 = vld [vmem:[#allocation7 + $0xc] sm:$0xf]
    %v177 = vld [vmem:[#allocation7 + $0x10] sm:$0xf]
    %v178 = vld [vmem:[#allocation7 + $0x14] sm:$0xf]
    %v179 = vld [vmem:[#allocation7 + $0x18] sm:$0xf]
    %v180 = vld [vmem:[#allocation7 + $0x1c] sm:$0xf]
    %v181 = vld [vmem:[#allocation7 + $0x20] sm:$0xf]
    %v182 = vld [vmem:[#allocation7 + $0x24] sm:$0xf]
    %v183 = vld [vmem:[#allocation7 + $0x28] sm:$0xf]
    %v184 = vld [vmem:[#allocation7 + $0x2c] sm:$0xf]
    %v185 = vld [vmem:[#allocation7 + $0x30] sm:$0xf]
    %v186 = vld [vmem:[#allocation7 + $0x34] sm:$0xf]
    %v187 = vld [vmem:[#allocation7 + $0x38] sm:$0xf]
    %v188 = vld [vmem:[#allocation7 + $0x3c] sm:$0xf]
    %v189 = vld [vmem:[%s3] sm:$0x1]
    %v191 = vperm.slane %v189, 0
    %v209 = vunpack.c.l.b16 %v173
    %v210 = vunpack.c.l.b16 %v174
    %v211 = vunpack.c.l.b16 %v175
    %v212 = vunpack.c.l.b16 %v176
    %v213 = vunpack.c.l.b16 %v177
    %v214 = vunpack.c.l.b16 %v178
    %v215 = vunpack.c.l.b16 %v179
    %v216 = vunpack.c.l.b16 %v180
    %v217 = vunpack.c.l.b16 %v181
    %v218 = vunpack.c.l.b16 %v182
    %v219 = vunpack.c.l.b16 %v183
    %v220 = vunpack.c.l.b16 %v184
    %v221 = vunpack.c.l.b16 %v185
    %v222 = vunpack.c.l.b16 %v186
    %v223 = vunpack.c.l.b16 %v187
    %v224 = vunpack.c.l.b16 %v188
    %v225 = vpack.c.b16 %v210, %v209
    %v226 = vpack.c.b16 %v212, %v211
    %v227 = vpack.c.b16 %v214, %v213
    %v228 = vpack.c.b16 %v216, %v215
    %v229 = vpack.c.b16 %v218, %v217
    %v230 = vpack.c.b16 %v220, %v219
    %v231 = vpack.c.b16 %v222, %v221
    %v232 = vpack.c.b16 %v224, %v223
    %241 = vmatpush.bf16.msra.mxu0 %v232
    %242 = vmatpush.bf16.msra.mxu0 %v231
    %243 = vmatpush.bf16.msra.mxu0 %v230
    %244 = vmatpush.bf16.msra.mxu0 %v229
    %245 = vmatpush.bf16.msra.mxu0 %v228
    %246 = vmatpush.bf16.msra.mxu0 %v227
    %247 = vmatpush.bf16.msra.mxu0 %v226
    %248 = vmatpush.bf16.msra.mxu0 %v225
    %249 = vmatmul.bf16.gmra.mxu0 %v172
    %v250 = vpop.f32.mrf.mxu0
    %v251 = vadd.f32 %v191, %v250
    %v252 = vpop.f32.mrf.mxu0
    %v253 = vadd.f32 %v191, %v252
    %254 = vdwg.mxu0
    %v255 = vmax.f32 %v251, 0.0
    %v256 = vmax.f32 %v253, 0.0
    %v257 = vpack.c.bf16 %v256, %v255
    %v258 = vld [vmem:[#allocation8] sm:$0xf]
    %v259 = vld [vmem:[#allocation8 + $0x4] sm:$0xf]
    %v260 = vld [vmem:[#allocation8 + $0x8] sm:$0xf]
    %v261 = vld [vmem:[#allocation8 + $0xc] sm:$0xf]
    %v262 = vld [vmem:[#allocation8 + $0x10] sm:$0xf]
    %v263 = vld [vmem:[#allocation8 + $0x14] sm:$0xf]
    %v264 = vld [vmem:[#allocation8 + $0x18] sm:$0xf]
    %v265 = vld [vmem:[#allocation8 + $0x1c] sm:$0xf]
    %v266 = vld [vmem:[#allocation8 + $0x20] sm:$0xf]
    %v267 = vld [vmem:[#allocation8 + $0x24] sm:$0xf]
    %v268 = vld [vmem:[#allocation8 + $0x28] sm:$0xf]
    %v269 = vld [vmem:[#allocation8 + $0x2c] sm:$0xf]
    %v270 = vld [vmem:[#allocation8 + $0x30] sm:$0xf]
    %v271 = vld [vmem:[#allocation8 + $0x34] sm:$0xf]
    %v272 = vld [vmem:[#allocation8 + $0x38] sm:$0xf]
    %v273 = vld [vmem:[#allocation8 + $0x3c] sm:$0xf]
    %v274 = vld [vmem:[%s5] sm:$0x1]
    %v276 = vperm.slane %v274, 0
    %v294 = vunpack.c.l.b16 %v258
    %v295 = vunpack.c.l.b16 %v259
    %v296 = vunpack.c.l.b16 %v260
    %v297 = vunpack.c.l.b16 %v261
    %v298 = vunpack.c.l.b16 %v262
    %v299 = vunpack.c.l.b16 %v263
    %v300 = vunpack.c.l.b16 %v264
    %v301 = vunpack.c.l.b16 %v265
    %v302 = vunpack.c.l.b16 %v266
    %v303 = vunpack.c.l.b16 %v267
    %v304 = vunpack.c.l.b16 %v268
    %v305 = vunpack.c.l.b16 %v269
    %v306 = vunpack.c.l.b16 %v270
    %v307 = vunpack.c.l.b16 %v271
    %v308 = vunpack.c.l.b16 %v272
    %v309 = vunpack.c.l.b16 %v273
    %v310 = vpack.c.b16 %v295, %v294
    %v311 = vpack.c.b16 %v297, %v296
    %v312 = vpack.c.b16 %v299, %v298
    %v313 = vpack.c.b16 %v301, %v300
    %v314 = vpack.c.b16 %v303, %v302
    %v315 = vpack.c.b16 %v305, %v304
    %v316 = vpack.c.b16 %v307, %v306
    %v317 = vpack.c.b16 %v309, %v308
    %326 = vmatpush.bf16.msra.mxu0 %v317
    %327 = vmatpush.bf16.msra.mxu0 %v316
    %328 = vmatpush.bf16.msra.mxu0 %v315
    %329 = vmatpush.bf16.msra.mxu0 %v314
    %330 = vmatpush.bf16.msra.mxu0 %v313
    %331 = vmatpush.bf16.msra.mxu0 %v312
    %332 = vmatpush.bf16.msra.mxu0 %v311
    %333 = vmatpush.bf16.msra.mxu0 %v310
    %334 = vmatmul.bf16.gmra.mxu0 %v257
    %v335 = vpop.f32.mrf.mxu0
    %v336 = vadd.f32 %v276, %v335
    %v337 = vpop.f32.mrf.mxu0
    %v338 = vadd.f32 %v276, %v337
    %339 = vdwg.mxu0
    %v340 = vmax.f32 %v336, 0.0
    %v341 = vmax.f32 %v338, 0.0
    %v342 = vpack.c.bf16 %v341, %v340
    %v343 = vld [vmem:[#allocation5] sm:$0xff]
    %v344 = vld [vmem:[#allocation5 + $0x8] sm:$0xff]
    %v345 = vpack.c.bf16 %v344, %v343
    %v346 = vld [vmem:[#allocation11] sm:$0xf]
    %v347 = vld [vmem:[#allocation11 + $0x4] sm:$0xf]
    %v348 = vld [vmem:[#allocation11 + $0x8] sm:$0xf]
    %v349 = vld [vmem:[#allocation11 + $0xc] sm:$0xf]
    %v350 = vld [vmem:[#allocation11 + $0x10] sm:$0xf]
    %v351 = vld [vmem:[#allocation11 + $0x14] sm:$0xf]
    %v352 = vld [vmem:[#allocation11 + $0x18] sm:$0xf]
    %v353 = vld [vmem:[#allocation11 + $0x1c] sm:$0xf]
    %v354 = vld [vmem:[#allocation11 + $0x20] sm:$0xf]
    %v355 = vld [vmem:[#allocation11 + $0x24] sm:$0xf]
    %v356 = vld [vmem:[#allocation11 + $0x28] sm:$0xf]
    %v357 = vld [vmem:[#allocation11 + $0x2c] sm:$0xf]
    %v358 = vld [vmem:[#allocation11 + $0x30] sm:$0xf]
    %v359 = vld [vmem:[#allocation11 + $0x34] sm:$0xf]
    %v360 = vld [vmem:[#allocation11 + $0x38] sm:$0xf]
    %v361 = vld [vmem:[#allocation11 + $0x3c] sm:$0xf]
    %v362 = vld [vmem:[%s8] sm:$0x1]
    %v364 = vperm.slane %v362, 0
    %v382 = vunpack.c.l.b16 %v346
    %v383 = vunpack.c.l.b16 %v347
    %v384 = vunpack.c.l.b16 %v348
    %v385 = vunpack.c.l.b16 %v349
    %v386 = vunpack.c.l.b16 %v350
    %v387 = vunpack.c.l.b16 %v351
    %v388 = vunpack.c.l.b16 %v352
    %v389 = vunpack.c.l.b16 %v353
    %v390 = vunpack.c.l.b16 %v354
    %v391 = vunpack.c.l.b16 %v355
    %v392 = vunpack.c.l.b16 %v356
    %v393 = vunpack.c.l.b16 %v357
    %v394 = vunpack.c.l.b16 %v358
    %v395 = vunpack.c.l.b16 %v359
    %v396 = vunpack.c.l.b16 %v360
    %v397 = vunpack.c.l.b16 %v361
    %v398 = vpack.c.b16 %v383, %v382
    %v399 = vpack.c.b16 %v385, %v384
    %v400 = vpack.c.b16 %v387, %v386
    %v401 = vpack.c.b16 %v389, %v388
    %v402 = vpack.c.b16 %v391, %v390
    %v403 = vpack.c.b16 %v393, %v392
    %v404 = vpack.c.b16 %v395, %v394
    %v405 = vpack.c.b16 %v397, %v396
    %414 = vmatpush.bf16.msra.mxu0 %v405
    %415 = vmatpush.bf16.msra.mxu0 %v404
    %416 = vmatpush.bf16.msra.mxu0 %v403
    %417 = vmatpush.bf16.msra.mxu0 %v402
    %418 = vmatpush.bf16.msra.mxu0 %v401
    %419 = vmatpush.bf16.msra.mxu0 %v400
    %420 = vmatpush.bf16.msra.mxu0 %v399
    %421 = vmatpush.bf16.msra.mxu0 %v398
    %422 = vmatmul.bf16.gmra.mxu0 %v345
    %v423 = vpop.f32.mrf.mxu0
    %v424 = vadd.f32 %v364, %v423
    %v425 = vpop.f32.mrf.mxu0
    %v426 = vadd.f32 %v364, %v425
    %427 = vdwg.mxu0
    %v428 = vmax.f32 %v424, 0.0
    %v429 = vmax.f32 %v426, 0.0
    %v430 = vpack.c.bf16 %v429, %v428
    %v431 = vld [vmem:[#allocation13] sm:$0xf]
    %v432 = vld [vmem:[#allocation13 + $0x4] sm:$0xf]
    %v433 = vld [vmem:[#allocation13 + $0x8] sm:$0xf]
    %v434 = vld [vmem:[#allocation13 + $0xc] sm:$0xf]
    %v435 = vld [vmem:[#allocation13 + $0x10] sm:$0xf]
    %v436 = vld [vmem:[#allocation13 + $0x14] sm:$0xf]
    %v437 = vld [vmem:[#allocation13 + $0x18] sm:$0xf]
    %v438 = vld [vmem:[#allocation13 + $0x1c] sm:$0xf]
    %v439 = vld [vmem:[#allocation13 + $0x20] sm:$0xf]
    %v440 = vld [vmem:[#allocation13 + $0x24] sm:$0xf]
    %v441 = vld [vmem:[#allocation13 + $0x28] sm:$0xf]
    %v442 = vld [vmem:[#allocation13 + $0x2c] sm:$0xf]
    %v443 = vld [vmem:[#allocation13 + $0x30] sm:$0xf]
    %v444 = vld [vmem:[#allocation13 + $0x34] sm:$0xf]
    %v445 = vld [vmem:[#allocation13 + $0x38] sm:$0xf]
    %v446 = vld [vmem:[#allocation13 + $0x3c] sm:$0xf]
    %v447 = vld [vmem:[%s10] sm:$0x1]
    %v449 = vperm.slane %v447, 0
    %v467 = vunpack.c.l.b16 %v431
    %v468 = vunpack.c.l.b16 %v432
    %v469 = vunpack.c.l.b16 %v433
    %v470 = vunpack.c.l.b16 %v434
    %v471 = vunpack.c.l.b16 %v435
    %v472 = vunpack.c.l.b16 %v436
    %v473 = vunpack.c.l.b16 %v437
    %v474 = vunpack.c.l.b16 %v438
    %v475 = vunpack.c.l.b16 %v439
    %v476 = vunpack.c.l.b16 %v440
    %v477 = vunpack.c.l.b16 %v441
    %v478 = vunpack.c.l.b16 %v442
    %v479 = vunpack.c.l.b16 %v443
    %v480 = vunpack.c.l.b16 %v444
    %v481 = vunpack.c.l.b16 %v445
    %v482 = vunpack.c.l.b16 %v446
    %v483 = vpack.c.b16 %v468, %v467
    %v484 = vpack.c.b16 %v470, %v469
    %v485 = vpack.c.b16 %v472, %v471
    %v486 = vpack.c.b16 %v474, %v473
    %v487 = vpack.c.b16 %v476, %v475
    %v488 = vpack.c.b16 %v478, %v477
    %v489 = vpack.c.b16 %v480, %v479
    %v490 = vpack.c.b16 %v482, %v481
    %499 = vmatpush.bf16.msra.mxu0 %v490
    %500 = vmatpush.bf16.msra.mxu0 %v489
    %501 = vmatpush.bf16.msra.mxu0 %v488
    %502 = vmatpush.bf16.msra.mxu0 %v487
    %503 = vmatpush.bf16.msra.mxu0 %v486
    %504 = vmatpush.bf16.msra.mxu0 %v485
    %505 = vmatpush.bf16.msra.mxu0 %v484
    %506 = vmatpush.bf16.msra.mxu0 %v483
    %507 = vmatmul.bf16.gmra.mxu0 %v430
    %v508 = vpop.f32.mrf.mxu0
    %v509 = vadd.f32 %v449, %v508
    %v510 = vpop.f32.mrf.mxu0
    %v511 = vadd.f32 %v449, %v510
    %512 = vdwg.mxu0
    %v513 = vmax.f32 %v509, 0.0
    %v514 = vmax.f32 %v511, 0.0
    %v515 = vpack.c.bf16 %v514, %v513
    %v516 = vld [vmem:[#allocation10] sm:$0xf]
    %v517 = vld [vmem:[#allocation10 + $0x4] sm:$0xf]
    %v518 = vld [vmem:[#allocation10 + $0x8] sm:$0xf]
    %v519 = vld [vmem:[#allocation10 + $0xc] sm:$0xf]
    %v520 = vld [vmem:[#allocation10 + $0x10] sm:$0xf]
    %v521 = vld [vmem:[#allocation10 + $0x14] sm:$0xf]
    %v522 = vld [vmem:[#allocation10 + $0x18] sm:$0xf]
    %v523 = vld [vmem:[#allocation10 + $0x1c] sm:$0xf]
    %v524 = vld [vmem:[#allocation10 + $0x20] sm:$0xf]
    %v525 = vld [vmem:[#allocation10 + $0x24] sm:$0xf]
    %v526 = vld [vmem:[#allocation10 + $0x28] sm:$0xf]
    %v527 = vld [vmem:[#allocation10 + $0x2c] sm:$0xf]
    %v528 = vld [vmem:[#allocation10 + $0x30] sm:$0xf]
    %v529 = vld [vmem:[#allocation10 + $0x34] sm:$0xf]
    %v530 = vld [vmem:[#allocation10 + $0x38] sm:$0xf]
    %v531 = vld [vmem:[#allocation10 + $0x3c] sm:$0xf]
    %v532 = vld [vmem:[#allocation14] sm:$0xf]
    %v533 = vld [vmem:[#allocation14 + $0x4] sm:$0xf]
    %v534 = vld [vmem:[#allocation14 + $0x8] sm:$0xf]
    %v535 = vld [vmem:[#allocation14 + $0xc] sm:$0xf]
    %v536 = vld [vmem:[#allocation14 + $0x10] sm:$0xf]
    %v537 = vld [vmem:[#allocation14 + $0x14] sm:$0xf]
    %v538 = vld [vmem:[#allocation14 + $0x18] sm:$0xf]
    %v539 = vld [vmem:[#allocation14 + $0x1c] sm:$0xf]
    %v540 = vld [vmem:[#allocation14 + $0x20] sm:$0xf]
    %v541 = vld [vmem:[#allocation14 + $0x24] sm:$0xf]
    %v542 = vld [vmem:[#allocation14 + $0x28] sm:$0xf]
    %v543 = vld [vmem:[#allocation14 + $0x2c] sm:$0xf]
    %v544 = vld [vmem:[#allocation14 + $0x30] sm:$0xf]
    %v545 = vld [vmem:[#allocation14 + $0x34] sm:$0xf]
    %v546 = vld [vmem:[#allocation14 + $0x38] sm:$0xf]
    %v547 = vld [vmem:[#allocation14 + $0x3c] sm:$0xf]
    %v564 = vunpack.c.l.b16 %v532
    %v565 = vunpack.c.l.b16 %v533
    %v566 = vunpack.c.l.b16 %v534
    %v567 = vunpack.c.l.b16 %v535
    %v568 = vunpack.c.l.b16 %v536
    %v569 = vunpack.c.l.b16 %v537
    %v570 = vunpack.c.l.b16 %v538
    %v571 = vunpack.c.l.b16 %v539
    %v572 = vunpack.c.l.b16 %v540
    %v573 = vunpack.c.l.b16 %v541
    %v574 = vunpack.c.l.b16 %v542
    %v575 = vunpack.c.l.b16 %v543
    %v576 = vunpack.c.l.b16 %v544
    %v577 = vunpack.c.l.b16 %v545
    %v578 = vunpack.c.l.b16 %v546
    %v579 = vunpack.c.l.b16 %v547
    %v580 = vpack.c.b16 %v565, %v564
    %v581 = vpack.c.b16 %v567, %v566
    %v582 = vpack.c.b16 %v569, %v568
    %v583 = vpack.c.b16 %v571, %v570
    %v584 = vpack.c.b16 %v573, %v572
    %v585 = vpack.c.b16 %v575, %v574
    %v586 = vpack.c.b16 %v577, %v576
    %v587 = vpack.c.b16 %v579, %v578
    %596 = vmatpush.bf16.msra.mxu0 %v587
    %597 = vmatpush.bf16.msra.mxu0 %v586
    %598 = vmatpush.bf16.msra.mxu0 %v585
    %599 = vmatpush.bf16.msra.mxu0 %v584
    %600 = vmatpush.bf16.msra.mxu0 %v583
    %601 = vmatpush.bf16.msra.mxu0 %v582
    %602 = vmatpush.bf16.msra.mxu0 %v581
    %603 = vmatpush.bf16.msra.mxu0 %v580
    %604 = vmatmul.bf16.gmra.mxu0 %v515
    %v605 = vpop.f32.mrf.mxu0
    %v606 = vadd.f32 0.0, %v605
    %v607 = vpop.f32.mrf.mxu0
    %v608 = vadd.f32 0.0, %v607
    %609 = vdwg.mxu0
    %v626 = vunpack.c.l.b16 %v516
    %v627 = vunpack.c.l.b16 %v517
    %v628 = vunpack.c.l.b16 %v518
    %v629 = vunpack.c.l.b16 %v519
    %v630 = vunpack.c.l.b16 %v520
    %v631 = vunpack.c.l.b16 %v521
    %v632 = vunpack.c.l.b16 %v522
    %v633 = vunpack.c.l.b16 %v523
    %v634 = vunpack.c.l.b16 %v524
    %v635 = vunpack.c.l.b16 %v525
    %v636 = vunpack.c.l.b16 %v526
    %v637 = vunpack.c.l.b16 %v527
    %v638 = vunpack.c.l.b16 %v528
    %v639 = vunpack.c.l.b16 %v529
    %v640 = vunpack.c.l.b16 %v530
    %v641 = vunpack.c.l.b16 %v531
    %v642 = vpack.c.b16 %v627, %v626
    %v643 = vpack.c.b16 %v629, %v628
    %v644 = vpack.c.b16 %v631, %v630
    %v645 = vpack.c.b16 %v633, %v632
    %v646 = vpack.c.b16 %v635, %v634
    %v647 = vpack.c.b16 %v637, %v636
    %v648 = vpack.c.b16 %v639, %v638
    %v649 = vpack.c.b16 %v641, %v640
    %658 = vmatpush.bf16.msra.mxu0 %v649
    %659 = vmatpush.bf16.msra.mxu0 %v648
    %660 = vmatpush.bf16.msra.mxu0 %v647
    %661 = vmatpush.bf16.msra.mxu0 %v646
    %662 = vmatpush.bf16.msra.mxu0 %v645
    %663 = vmatpush.bf16.msra.mxu0 %v644
    %664 = vmatpush.bf16.msra.mxu0 %v643
    %665 = vmatpush.bf16.msra.mxu0 %v642
    %666 = vmatmul.bf16.gmra.mxu0 %v342
    %v667 = vpop.f32.mrf.mxu0
    %v668 = vadd.f32 %v606, %v667
    %v669 = vpop.f32.mrf.mxu0
    %v670 = vadd.f32 %v608, %v669
    %671 = vdwg.mxu0
    %v672 = vld [vmem:[%s12] sm:$0x1]
    %v674 = vperm.slane %v672, 0
    %v676 = vadd.f32 %v668, %v674
    %v677 = vadd.f32 %v670, %v674
    %678 = vst [vmem:[#allocation16] sm:$0xff] %v676
    %679 = vst [vmem:[#allocation16 + $0x8] sm:$0xff] %v677
    // Predicated region
    $region86: #{tpu_custom_call.1} parent=1 // pred_check
      _
    $region87: #{tpu_custom_call.1} parent=1 // pred_check_branch
      %681 = sbr.rel (0) target = $region89
    $region88: #{tpu_custom_call.1} parent=1 // pred_region
      %683 = vsyncadd [#allocation4], 0
      %s684 = sshll.u32 [#allocation16], 4
      %s685 = int_to_ptr.vmem [resolvable:$true] %s684
      %s686 = sshll.u32 %s13, 4
      %s687 = int_to_ptr.hbm [resolvable:$true] %s686
      %692 = dma.vmem_to_hbm [thread:$0]  %s685, 256, %s687, [#allocation4], 128, 128, 8
    $region89: #{tpu_custom_call.1} parent=1 // pred_fallthru
      _
    // Predicated region
    $region90: #{tpu_custom_call.1} parent=1 // pred_check
      _
    $region91: #{tpu_custom_call.1} parent=1 // pred_check_branch
      %694 = sbr.rel (0) target = $region93
    $region92: #{tpu_custom_call.1} parent=1 // pred_region
      %696 = dma.done [#allocation4], 256
    $region93: #{tpu_custom_call.1} parent=1 // pred_fallthru
      _
    %697 = vsyncpa [#allocation3], 1
    %698 = vsyncpa [#allocation6], 1
    %699 = vsyncpa [#allocation9], 1
    %700 = vsyncpa [#allocation12], 1
    %701 = vsyncpa [#allocation15], 1
    %702 = vsyncpa [#allocation4], 1

</llo_original>
